<compile_context>
chip_gen: v6e
topology: v6e:2x2x1
jax: 0.10.0
libtpu: 0.0.40
codegen_flags: <defaults>
</compile_context>

<pallas_src>
import math
import functools

import jax
import jax.numpy as jnp
from jax import lax
from jax.experimental import pallas as pl
from jax.experimental.pallas import tpu as pltpu


# ---------------------------------------------------------------------------
# Pallas kernel. Grid = (B, H): batch is "parallel", heads are "arbitrary"
# (the f32 output accumulator carries state across the head axis).
# ---------------------------------------------------------------------------
def _t5_attention_kernel(x_ref, wqkv_ref, wo_ref, bias_ref, o_ref, acc_ref,
                         *, dkp):
    h = pl.program_id(1)
    last_h = pl.num_programs(1) - 1
    cdt = x_ref.dtype  # compute dtype for MXU operands (f32 or bf16)

    @pl.when(h == 0)
    def _init():
        acc_ref[...] = jnp.zeros_like(acc_ref)

    x = x_ref[0]                                                   # [S, D]

    # Fused per-head Q/K/V projection: one [S, D] @ [D, 3*dkp] matmul
    # (f32 accumulation). The packed weight layout is q | k | v, each padded
    # to dkp lanes, so the slices below are static and 128-lane aligned.
    qkv = jnp.dot(x, wqkv_ref[0], preferred_element_type=jnp.float32)
    qh = qkv[:, 0 * dkp:1 * dkp].astype(cdt)                       # [S, dkp]
    kh = qkv[:, 1 * dkp:2 * dkp].astype(cdt)                       # [S, dkp]
    vh = qkv[:, 2 * dkp:3 * dkp].astype(cdt)                       # [S, dkp]

    # scores = q @ k^T without materializing a transpose (contract last dims).
    # No 1/sqrt(dk) scaling (T5 convention). Bias stays f32.
    scores = lax.dot_general(qh, kh, (((1,), (1,)), ((), ())),
                             preferred_element_type=jnp.float32)   # [S, S] f32
    scores = scores + bias_ref[0]

    # Softmax over the key axis in float32 (matches torch's `.float()`),
    # exact normalization (parity with nn.functional.softmax).
    m = jnp.max(scores, axis=-1, keepdims=True)
    e = jnp.exp(scores - m)
    denom = jnp.sum(e, axis=-1, keepdims=True)
    attn = (e / denom).astype(cdt)                                 # [S, S]

    # ctx_h = attn @ v ; partial output projection ctx_h @ Wo_h accumulated
    # across heads in f32 (padded rows of Wo_h are zero, so padding is inert).
    ctx_h = jnp.dot(attn, vh, preferred_element_type=jnp.float32).astype(cdt)
    acc_ref[...] += jnp.dot(ctx_h, wo_ref[0],
                            preferred_element_type=jnp.float32)    # [S, D] f32

    @pl.when(h == last_h)
    def _finalize():
        o_ref[0] = acc_ref[...].astype(o_ref.dtype)

    # TODO(synk): for long sequences add a query-tile grid axis (flash-style
    # online softmax) so the [S, S] f32 scores tensor need not fit VMEM whole.


# ---------------------------------------------------------------------------
# Weight packing (one-time, plain JAX; in production do this at load time).
# ---------------------------------------------------------------------------
def _pack_qkv_weights(wq, wk, wv, n_heads, d_kv, dkp):
    """[D, H*d_kv] x3  ->  [H, D, 3*dkp] with per-head q|k|v, zero-padded."""
    D = wq.shape[0]

    def per_head(w):
        w = w.reshape(D, n_heads, d_kv)
        w = jnp.pad(w, ((0, 0), (0, 0), (0, dkp - d_kv)))
        return jnp.transpose(w, (1, 0, 2))                 # [H, D, dkp]

    return jnp.concatenate([per_head(wq), per_head(wk), per_head(wv)], axis=-1)


def _pack_o_weights(wo, n_heads, d_kv, dkp):
    """[H*d_kv, D]  ->  [H, dkp, D], padded rows are zero."""
    inner, D = wo.shape
    w = wo.reshape(n_heads, d_kv, D)
    return jnp.pad(w, ((0, 0), (0, dkp - d_kv), (0, 0)))   # [H, dkp, D]


def _estimate_vmem_bytes(S, D, dkp, cdt):
    isz = jnp.dtype(cdt).itemsize
    per_step_blocks = (
        S * D * isz              # x block
        + D * 3 * dkp * isz      # packed Wqkv head block
        + dkp * D * isz          # Wo head block
        + S * S * 4              # bias head block (f32)
        + S * D * isz            # output block
    )
    scratch = S * D * 4          # f32 accumulator
    return 2 * per_step_blocks + scratch      # pipeline double-buffering


# ---------------------------------------------------------------------------
# Wrapper.
# ---------------------------------------------------------------------------
def t5_attention_pallas(hidden_states, wq, wk, wv, wo, position_bias):
    """hidden_states: [B,S,D]; wq/wk/wv: [D,inner]; wo: [inner,D]; bias: [H,S,S]."""
    B, S, D = hidden_states.shape
    H = position_bias.shape[0]
    inner = wq.shape[1]
    d_kv = inner // H
    dkp = ((d_kv + 127) // 128) * 128          # lane-tile aligned per-head width
    cdt = hidden_states.dtype

    wqkv = _pack_qkv_weights(wq, wk, wv, H, d_kv, dkp).astype(cdt)   # [H, D, 3*dkp]
    wo_p = _pack_o_weights(wo, H, d_kv, dkp).astype(cdt)             # [H, dkp, D]
    bias_f32 = position_bias.astype(jnp.float32)                     # [H, S, S]

    est = _estimate_vmem_bytes(S, D, dkp, cdt)
    vmem_limit = int(min(max(4 * est, 16 * 1024 * 1024), 48 * 1024 * 1024))

    kernel = functools.partial(_t5_attention_kernel, dkp=dkp)

    return pl.pallas_call(
        kernel,
        out_shape=jax.ShapeDtypeStruct((B, S, D), hidden_states.dtype),
        grid_spec=pltpu.PrefetchScalarGridSpec(
            num_scalar_prefetch=0,
            grid=(B, H),
            in_specs=[
                pl.BlockSpec((1, S, D), lambda b, h: (b, 0, 0)),          # x[b]
                pl.BlockSpec((1, D, 3 * dkp), lambda b, h: (h, 0, 0)),    # Wqkv[h]
                pl.BlockSpec((1, dkp, D), lambda b, h: (h, 0, 0)),        # Wo[h]
                pl.BlockSpec((1, S, S), lambda b, h: (h, 0, 0)),          # bias[h]
            ],
            out_specs=pl.BlockSpec((1, S, D), lambda b, h: (b, 0, 0)),
            scratch_shapes=[
                pltpu.VMEM((S, D), jnp.float32),   # output accumulator (over heads)
            ],
        ),
        compiler_params=pltpu.CompilerParams(
            dimension_semantics=("parallel", "arbitrary"),
            vmem_limit_bytes=vmem_limit,
        ),
    )(hidden_states, wqkv, wo_p, bias_f32)


# ---------------------------------------------------------------------------
# Glue (plain JAX): T5 relative position bucketing + bias lookup.
# ---------------------------------------------------------------------------
def _relative_position_bucket(relative_position, bidirectional=True,
                              num_buckets=32, max_distance=128):
    relative_buckets = jnp.zeros_like(relative_position)
    if bidirectional:
        num_buckets //= 2
        relative_buckets += (relative_position > 0).astype(jnp.int32) * num_buckets
        relative_position = jnp.abs(relative_position)
    else:
        relative_position = -jnp.minimum(relative_position,
                                         jnp.zeros_like(relative_position))
    max_exact = num_buckets // 2
    is_small = relative_position < max_exact
    # Clamp to >=1 so log(0) never produces -inf on the (masked-out) branch.
    rp_safe = jnp.maximum(relative_position, 1)
    rp_if_large = max_exact + (
        jnp.log(rp_safe.astype(jnp.float32) / max_exact)
        / math.log(max_distance / max_exact)
        * (num_buckets - max_exact)
    ).astype(jnp.int32)
    rp_if_large = jnp.minimum(rp_if_large, num_buckets - 1)
    relative_buckets += jnp.where(is_small, relative_position, rp_if_large)
    return relative_buckets


def compute_position_bias(rel_bias_table, query_length, key_length,
                          num_buckets, max_distance, is_decoder=False):
    """rel_bias_table: [num_buckets, n_heads] -> bias [n_heads, q_len, k_len]."""
    context_position = jnp.arange(query_length, dtype=jnp.int32)[:, None]
    memory_position = jnp.arange(key_length, dtype=jnp.int32)[None, :]
    relative_position = memory_position - context_position
    buckets = _relative_position_bucket(
        relative_position, bidirectional=not is_decoder,
        num_buckets=num_buckets, max_distance=max_distance)
    values = rel_bias_table[buckets]                 # [q, k, H]
    return jnp.transpose(values, (2, 0, 1))          # [H, q, k]


# ---------------------------------------------------------------------------
# Pure-JAX reference for correctness checking.
# ---------------------------------------------------------------------------
def t5_attention_ref(x, wq, wk, wv, wo, bias):
    B, S, D = x.shape
    H = bias.shape[0]
    inner = wq.shape[1]
    dk = inner // H
    q = (x @ wq).reshape(B, S, H, dk).transpose(0, 2, 1, 3)   # [B,H,S,dk]
    k = (x @ wk).reshape(B, S, H, dk).transpose(0, 2, 1, 3)
    v = (x @ wv).reshape(B, S, H, dk).transpose(0, 2, 1, 3)
    scores = jnp.einsum('bhqd,bhkd->bhqk', q, k) + bias[None]
    attn = jax.nn.softmax(scores.astype(jnp.float32), axis=-1).astype(scores.dtype)
    ctx = jnp.einsum('bhqk,bhkd->bhqd', attn, v)
    ctx = ctx.transpose(0, 2, 1, 3).reshape(B, S, inner)
    return ctx @ wo


if __name__ == "__main__":
    # Small, lane-dense T5-like hyperparameters.
    B, S = 2, 128
    d_model = 256
    n_heads = 4
    d_kv = 64
    inner_dim = n_heads * d_kv            # 256
    num_buckets = 32
    max_distance = 128
    is_decoder = False

    key = jax.random.PRNGKey(0)
    k_x, k_q, k_k, k_v, k_o, k_b = jax.random.split(key, 6)

    scale = 0.03
    hidden_states = jax.random.normal(k_x, (B, S, d_model), dtype=jnp.float32)
    # nn.Linear(d_model, inner_dim, bias=False): y = x @ W.T ==> store [D, inner].
    Wq = jax.random.normal(k_q, (d_model, inner_dim), dtype=jnp.float32) * scale
    Wk = jax.random.normal(k_k, (d_model, inner_dim), dtype=jnp.float32) * scale
    Wv = jax.random.normal(k_v, (d_model, inner_dim), dtype=jnp.float32) * scale
    Wo = jax.random.normal(k_o, (inner_dim, d_model), dtype=jnp.float32) * scale
    rel_bias_table = jax.random.normal(k_b, (num_buckets, n_heads),
                                       dtype=jnp.float32) * 0.1

    position_bias = compute_position_bias(
        rel_bias_table, S, S, num_buckets, max_distance, is_decoder)  # [H, S, S]

    # ---- f32 path: strict check against the module semantics -------------
    out_f32 = t5_attention_pallas(hidden_states, Wq, Wk, Wv, Wo, position_bias)
    out_f32 = jax.block_until_ready(out_f32)
    ref_f32 = t5_attention_ref(hidden_states, Wq, Wk, Wv, Wo, position_bias)
    assert out_f32.shape == (B, S, d_model)
    err32 = float(jnp.max(jnp.abs(out_f32 - ref_f32)))
    assert jnp.allclose(out_f32, ref_f32, atol=2e-3, rtol=2e-3), err32

    # ---- bf16 path: MXU-native fast path (looser tolerance) --------------
    bf = lambda a: a.astype(jnp.bfloat16)
    out_bf16 = t5_attention_pallas(bf(hidden_states), bf(Wq), bf(Wk), bf(Wv),
                                   bf(Wo), position_bias)  # bias stays f32
    out_bf16 = jax.block_until_ready(out_bf16)
    ref_bf16 = t5_attention_ref(bf(hidden_states).astype(jnp.float32),
                                bf(Wq).astype(jnp.float32),
                                bf(Wk).astype(jnp.float32),
                                bf(Wv).astype(jnp.float32),
                                bf(Wo).astype(jnp.float32),
                                position_bias)
    err16 = float(jnp.max(jnp.abs(out_bf16.astype(jnp.float32) - ref_bf16)))
    assert jnp.allclose(out_bf16.astype(jnp.float32), ref_bf16,
                        atol=1e-1, rtol=1e-1), err16

    # TODO(synk): past_key_value / cross-attention / attention-mask /
    # layer_head_mask / training-dropout paths are not exercised
    # (encoder self-attention, eval mode).
    print("KERNEL_OK")
</pallas_src>

<mosaic_0001>
module attributes {stable_mosaic.version = 11 : i64} {
  func.func @_t5_attention_kernel(%arg0: i32, %arg1: i32, %arg2: memref<1x128x256xf32, #tpu.memory_space<vmem>>, %arg3: memref<1x256x384xf32, #tpu.memory_space<vmem>>, %arg4: memref<1x128x256xf32, #tpu.memory_space<vmem>>, %arg5: memref<1x128x128xf32, #tpu.memory_space<vmem>>, %arg6: memref<1x128x256xf32, #tpu.memory_space<vmem>>, %arg7: memref<128x256xf32, #tpu.memory_space<vmem>>) attributes {dimension_semantics = [#tpu.dimension_semantics<parallel>, #tpu.dimension_semantics<arbitrary>], iteration_bounds = array<i64: 2, 4>, scalar_prefetch = 0 : i64, scratch_operands = 1 : i64, tpu.core_type = #tpu.core_type<tc>, window_params = [{transform_indices = @transform_0, window_bounds = array<i64: 1, 128, 256>}, {transform_indices = @transform_1, window_bounds = array<i64: 1, 256, 384>}, {transform_indices = @transform_2, window_bounds = array<i64: 1, 128, 256>}, {transform_indices = @transform_3, window_bounds = array<i64: 1, 128, 128>}, {transform_indices = @transform_4, window_bounds = array<i64: 1, 128, 256>}]} {
    %c0_i32 = arith.constant 0 : i32
    %0 = arith.cmpi eq, %arg1, %c0_i32 : i32
    %1 = arith.extui %0 : i1 to i32
    %c0_i32_0 = arith.constant 0 : i32
    %2 = arith.cmpi ne, %1, %c0_i32_0 : i32
    scf.if %2 {
      %cst_22 = arith.constant 0.000000e+00 : f32
      %34 = vector.broadcast %cst_22 : f32 to vector<128x256xf32>
      %c0_23 = arith.constant 0 : index
      %c0_24 = arith.constant 0 : index
      %35 = vector.load %arg7[%c0_23, %c0_24] : memref<128x256xf32, #tpu.memory_space<vmem>>, vector<128x256xf32>
      tpu.vector_store %arg7[%c0_23, %c0_24], %34 {strides = array<i32>} : memref<128x256xf32, #tpu.memory_space<vmem>>, vector<128x256xf32>,
    } else {
    }
    %c0 = arith.constant 0 : index
    %c0_1 = arith.constant 0 : index
    %c0_2 = arith.constant 0 : index
    %3 = vector.load %arg2[%c0, %c0_1, %c0_2] : memref<1x128x256xf32, #tpu.memory_space<vmem>>, vector<1x128x256xf32>
    %4 = vector.shape_cast %3 : vector<1x128x256xf32> to vector<128x256xf32>
    %c0_3 = arith.constant 0 : index
    %c0_4 = arith.constant 0 : index
    %c0_5 = arith.constant 0 : index
    %5 = vector.load %arg3[%c0_3, %c0_4, %c0_5] : memref<1x256x384xf32, #tpu.memory_space<vmem>>, vector<1x256x384xf32>
    %6 = vector.shape_cast %5 : vector<1x256x384xf32> to vector<256x384xf32>
    %cst = arith.constant dense<0.000000e+00> : vector<128x384xf32>
    %7 = tpu.matmul %4, %6, %cst {dimension_numbers = #tpu.dot_dimension_numbers<[1], [0], [0], [1], [0, 0, 1, 1], [], []>} : vector<128x256xf32>, vector<256x384xf32>, vector<128x384xf32> -> vector<128x384xf32>
    %8 = vector.extract_strided_slice %7 {offsets = [0, 0], sizes = [128, 128], strides = [1, 1]} : vector<128x384xf32> to vector<128x128xf32>
    %9 = vector.extract_strided_slice %7 {offsets = [0, 128], sizes = [128, 128], strides = [1, 1]} : vector<128x384xf32> to vector<128x128xf32>
    %10 = vector.extract_strided_slice %7 {offsets = [0, 256], sizes = [128, 128], strides = [1, 1]} : vector<128x384xf32> to vector<128x128xf32>
    %cst_6 = arith.constant dense<0.000000e+00> : vector<128x128xf32>
    %11 = tpu.matmul %8, %9, %cst_6 {dimension_numbers = #tpu.dot_dimension_numbers<[1], [1], [0], [0], [0, 0, 1, 0], [], []>} : vector<128x128xf32>, vector<128x128xf32>, vector<128x128xf32> -> vector<128x128xf32>
    %c0_7 = arith.constant 0 : index
    %c0_8 = arith.constant 0 : index
    %c0_9 = arith.constant 0 : index
    %12 = vector.load %arg5[%c0_7, %c0_8, %c0_9] : memref<1x128x128xf32, #tpu.memory_space<vmem>>, vector<1x128x128xf32>
    %13 = vector.shape_cast %12 : vector<1x128x128xf32> to vector<128x128xf32>
    %14 = arith.addf %11, %13 : vector<128x128xf32>
    %cst_10 = arith.constant dense<0xFF800000> : vector<128xf32>
    %15 = vector.multi_reduction <maximumf>, %14, %cst_10 [1] : vector<128x128xf32> to vector<128xf32>
    %16 = vector.shape_cast %15 : vector<128xf32> to vector<128x1xf32>
    %17 = vector.broadcast %16 : vector<128x1xf32> to vector<128x128xf32>
    %18 = arith.subf %14, %17 : vector<128x128xf32>
    %19 = math.exp %18 : vector<128x128xf32>
    %cst_11 = arith.constant dense<0.000000e+00> : vector<128xf32>
    %20 = vector.multi_reduction <add>, %19, %cst_11 [1] : vector<128x128xf32> to vector<128xf32>
    %21 = vector.shape_cast %20 : vector<128xf32> to vector<128x1xf32>
    %22 = vector.broadcast %21 : vector<128x1xf32> to vector<128x128xf32>
    %23 = arith.divf %19, %22 : vector<128x128xf32>
    %cst_12 = arith.constant dense<0.000000e+00> : vector<128x128xf32>
    %24 = tpu.matmul %23, %10, %cst_12 {dimension_numbers = #tpu.dot_dimension_numbers<[1], [0], [0], [1], [0, 0, 1, 1], [], []>} : vector<128x128xf32>, vector<128x128xf32>, vector<128x128xf32> -> vector<128x128xf32>
    %c0_13 = arith.constant 0 : index
    %c0_14 = arith.constant 0 : index
    %25 = vector.load %arg7[%c0_13, %c0_14] : memref<128x256xf32, #tpu.memory_space<vmem>>, vector<128x256xf32>
    %c0_15 = arith.constant 0 : index
    %c0_16 = arith.constant 0 : index
    %c0_17 = arith.constant 0 : index
    %26 = vector.load %arg4[%c0_15, %c0_16, %c0_17] : memref<1x128x256xf32, #tpu.memory_space<vmem>>, vector<1x128x256xf32>
    %27 = vector.shape_cast %26 : vector<1x128x256xf32> to vector<128x256xf32>
    %cst_18 = arith.constant dense<0.000000e+00> : vector<128x256xf32>
    %28 = tpu.matmul %24, %27, %cst_18 {dimension_numbers = #tpu.dot_dimension_numbers<[1], [0], [0], [1], [0, 0, 1, 1], [], []>} : vector<128x128xf32>, vector<128x256xf32>, vector<128x256xf32> -> vector<128x256xf32>
    %29 = arith.addf %25, %28 : vector<128x256xf32>
    %c0_19 = arith.constant 0 : index
    %c0_20 = arith.constant 0 : index
    %30 = vector.load %arg7[%c0_19, %c0_20] : memref<128x256xf32, #tpu.memory_space<vmem>>, vector<128x256xf32>
    tpu.vector_store %arg7[%c0_19, %c0_20], %29 {strides = array<i32>} : memref<128x256xf32, #tpu.memory_space<vmem>>, vector<128x256xf32>,
    %c3_i32 = arith.constant 3 : i32
    %31 = arith.cmpi eq, %arg1, %c3_i32 : i32
    %32 = arith.extui %31 : i1 to i32
    %c0_i32_21 = arith.constant 0 : i32
    %33 = arith.cmpi ne, %32, %c0_i32_21 : i32
    scf.if %33 {
      %c0_22 = arith.constant 0 : index
      %c0_23 = arith.constant 0 : index
      %34 = vector.load %arg7[%c0_22, %c0_23] : memref<128x256xf32, #tpu.memory_space<vmem>>, vector<128x256xf32>
      %c0_24 = arith.constant 0 : index
      %c0_25 = arith.constant 0 : index
      %c0_26 = arith.constant 0 : index
      %35 = vector.load %arg6[%c0_24, %c0_25, %c0_26] : memref<1x128x256xf32, #tpu.memory_space<vmem>>, vector<1x128x256xf32>
      %36 = vector.shape_cast %35 : vector<1x128x256xf32> to vector<128x256xf32>
      %37 = vector.shape_cast %34 : vector<128x256xf32> to vector<1x128x256xf32>
      tpu.vector_store %arg6[%c0_24, %c0_25, %c0_26], %37 {strides = array<i32>} : memref<1x128x256xf32, #tpu.memory_space<vmem>>, vector<1x128x256xf32>,
    } else {
    }
    return
  }
  func.func @transform_0(%arg0: i32, %arg1: i32) -> (i32, i32, i32) {
    %c0_i32 = arith.constant 0 : i32
    %c0_i32_0 = arith.constant 0 : i32
    %c0_i32_1 = arith.constant 0 : i32
    return %arg0, %c0_i32, %c0_i32_0 : i32, i32, i32
  }
  func.func @transform_1(%arg0: i32, %arg1: i32) -> (i32, i32, i32) {
    %c0_i32 = arith.constant 0 : i32
    %c0_i32_0 = arith.constant 0 : i32
    %c0_i32_1 = arith.constant 0 : i32
    return %arg1, %c0_i32, %c0_i32_0 : i32, i32, i32
  }
  func.func @transform_2(%arg0: i32, %arg1: i32) -> (i32, i32, i32) {
    %c0_i32 = arith.constant 0 : i32
    %c0_i32_0 = arith.constant 0 : i32
    %c0_i32_1 = arith.constant 0 : i32
    return %arg1, %c0_i32, %c0_i32_0 : i32, i32, i32
  }
  func.func @transform_3(%arg0: i32, %arg1: i32) -> (i32, i32, i32) {
    %c0_i32 = arith.constant 0 : i32
    %c0_i32_0 = arith.constant 0 : i32
    %c0_i32_1 = arith.constant 0 : i32
    return %arg1, %c0_i32, %c0_i32_0 : i32, i32, i32
  }
  func.func @transform_4(%arg0: i32, %arg1: i32) -> (i32, i32, i32) {
    %c0_i32 = arith.constant 0 : i32
    %c0_i32_0 = arith.constant 0 : i32
    %c0_i32_1 = arith.constant 0 : i32
    return %arg0, %c0_i32, %c0_i32_0 : i32, i32, i32
  }
}

</mosaic_0001>

<llo_original>
// kernel: tpu_custom_call.1
$region0: #{tpu_custom_call.1}
  #allocation0 [shape = 'u32[]', space=smem, size = 0x4, offset = 0x4, fixed_abs, tag = 'smem constant byte address 0x4 - core index']
  #allocation1 [shape = 'u32[144,128]{1,0:T(1,128)}', space=vmem, size = 0x12000, scoped, tag = 'internal scratch']
  #allocation2 [shape = 'f32[128,256]{1,0:T(8,128)}', space=vmem, size = 0x20000, scoped, tag = 'scratch operand']
  %s0 = inlined_call_operand.hbm [shape: f32[2,128,256], index: 0, kind: input, shape index: {}]
  %s1 = inlined_call_operand.hbm [shape: f32[4,256,384], index: 1, kind: input, shape index: {}]
  %s2 = inlined_call_operand.hbm [shape: f32[4,128,256], index: 2, kind: input, shape index: {}]
  %s3 = inlined_call_operand.hbm [shape: f32[4,128,128], index: 3, kind: input, shape index: {}]
  %s4 = inlined_call_operand.hbm [shape: f32[2,128,256], index: 4, kind: output, shape index: {}]
  %s5 = sld [smem:[#allocation0]]
  $region73: #{tpu_custom_call.1} parent=0
    _
  %s7 = ssub.s32 1, %s5
  %s8 = scalar_select 0, %s7, %s5
  $region1: #{tpu_custom_call.1} parent=0
    #allocation3 [shape = 'u8[262144]{0}', space=vmem, size = 0x40000, scoped, tag = 'input window, operand 0']
    #allocation4 [shape = 's32[2]{0}', space=sflag, size = 0x8, scoped, tag = 'scoped memory for tpu_custom_call.1']
    #allocation5 [shape = 's32[2]{0}', space=sflag, size = 0x8, scoped, tag = 'scoped memory for tpu_custom_call.1']
    #allocation6 [shape = 'u8[786432]{0}', space=vmem, size = 0xc0000, scoped, tag = 'input window, operand 1']
    #allocation7 [shape = 's32[2]{0}', space=sflag, size = 0x8, scoped, tag = 'scoped memory for tpu_custom_call.1']
    #allocation8 [shape = 'u8[262144]{0}', space=vmem, size = 0x40000, scoped, tag = 'input window, operand 2']
    #allocation9 [shape = 'u8[131072]{0}', space=vmem, size = 0x20000, scoped, tag = 'input window, operand 3']
    #allocation10 [shape = 's32[2]{0}', space=sflag, size = 0x8, scoped, tag = 'scoped memory for tpu_custom_call.1']
    #allocation11 [shape = 'u8[262144]{0}', space=vmem, size = 0x40000, scoped, tag = 'output window, operand 0']
    %9 = vsyncpa [#allocation4], 0
    %s10 = scalar_lea.sflag [#allocation4], 1
    %11 = vsyncpa %s10, 0
    %12 = vsyncpa [#allocation7], 0
    %s13 = scalar_lea.sflag [#allocation7], 1
    %14 = vsyncpa %s13, 0
    %15 = vsyncpa [#allocation10], 0
    %s16 = scalar_lea.sflag [#allocation10], 1
    %17 = vsyncpa %s16, 0
    %18 = vsyncpa [#allocation5], 0
    %s19 = scalar_lea.sflag [#allocation5], 1
    %20 = vsyncpa %s19, 0
    loop: start=0, step=1, limit=10
    $region2: #{tpu_custom_call.1} parent=1 // loop_pre_header
      _
    $region3: #{tpu_custom_call.1} parent=1 // loop_header
      %s22 = sphi 0, %s26
      %p23 = scmp.ge.s32.totalorder %s22, 10
      %s29 = sphi 0, %s41
      %s30 = sphi 0, %s37
      %s31 = sphi 0, %s29
      %s32 = sphi 0, %s30
      %s33 = sphi 0, %s31
      %s34 = sphi 0, %s32
      %s44 = sphi 0, %s46
      %s47 = sphi 0, %s44
      %s48 = sphi 0, %s47
      %s64 = sphi 0, %s48
      %s70 = sphi 0, %s72
      %s73 = sphi 0, %s70
      %s74 = sphi 0, %s73
      %s90 = sphi 0, %s74
      %s96 = sphi 0, %s98
      %s99 = sphi 0, %s96
      %s100 = sphi 0, %s99
      %s116 = sphi 0, %s100
      %s122 = sphi 0, %s124
      %s125 = sphi 0, %s122
      %s126 = sphi 0, %s125
      %s142 = sphi 0, %s126
      %s148 = sphi 0, %s150
      %s151 = sphi 0, %s148
      %s152 = sphi 0, %s151
      %s168 = sphi 0, %s152
    $region4: #{tpu_custom_call.1} parent=1 // loop_header_branch
      %25 = sbr.rel (%p23) target = $region8
    $region5: #{tpu_custom_call.1} parent=1 // loop_body
      %s27 = ssub.s32 %s22, 1
      %s28 = ssub.s32 %s22, 2
      %s35 = sadd.s32 1, %s30
      %p36 = scmp.ge.s32.totalorder %s35, 4
      %s37 = scalar_select %p36, 0, %s35
      %s38 = sadd.s32 1, %s29
      %s39 = scalar_select %p36, %s38, %s29
      %p40 = scmp.ge.s32.totalorder %s39, 2
      %s41 = scalar_select %p40, 0, %s39
      %s42 = ssub.s32 %s29, %s41
      %p43 = scmp.eq.s32.totalorder %s42, 0
      %s45 = sadd.s32 %s44, 1
      %s46 = scalar_select %p43, %s44, %s45
      %p49 = pneg %p43
      %p50 = scmp.eq.s32.totalorder %s22, 7
      %p51 = por %p49, %p50
      %p52 = scmp.ne.s32.totalorder %s44, %s47
      %p53 = scmp.eq.s32.totalorder %s22, 0
      %p54 = por %p52, %p53
      %p55 = scmp.ne.s32.totalorder %s44, %s47
      %p56 = scmp.eq.s32.totalorder %s27, 7
      %p57 = por %p55, %p56
      %p58 = scmp.ne.s32.totalorder %s47, %s48
      %p59 = scmp.eq.s32.totalorder %s27, 0
      %p60 = por %p58, %p59
      %p61 = scmp.ne.s32.totalorder %s47, %s48
      %p62 = scmp.eq.s32.totalorder %s28, 7
      %p63 = por %p61, %p62
      %p65 = scmp.ne.s32.totalorder %s48, %s64
      %p66 = scmp.eq.s32.totalorder %s28, 0
      %p67 = por %p65, %p66
      %s68 = ssub.s32 %s30, %s37
      %p69 = scmp.eq.s32.totalorder %s68, 0
      %s71 = sadd.s32 %s70, 1
      %s72 = scalar_select %p69, %s70, %s71
      %p75 = pneg %p69
      %p76 = scmp.eq.s32.totalorder %s22, 7
      %p77 = por %p75, %p76
      %p78 = scmp.ne.s32.totalorder %s70, %s73
      %p79 = scmp.eq.s32.totalorder %s22, 0
      %p80 = por %p78, %p79
      %p81 = scmp.ne.s32.totalorder %s70, %s73
      %p82 = scmp.eq.s32.totalorder %s27, 7
      %p83 = por %p81, %p82
      %p84 = scmp.ne.s32.totalorder %s73, %s74
      %p85 = scmp.eq.s32.totalorder %s27, 0
      %p86 = por %p84, %p85
      %p87 = scmp.ne.s32.totalorder %s73, %s74
      %p88 = scmp.eq.s32.totalorder %s28, 7
      %p89 = por %p87, %p88
      %p91 = scmp.ne.s32.totalorder %s74, %s90
      %p92 = scmp.eq.s32.totalorder %s28, 0
      %p93 = por %p91, %p92
      %s94 = ssub.s32 %s30, %s37
      %p95 = scmp.eq.s32.totalorder %s94, 0
      %s97 = sadd.s32 %s96, 1
      %s98 = scalar_select %p95, %s96, %s97
      %p101 = pneg %p95
      %p102 = scmp.eq.s32.totalorder %s22, 7
      %p103 = por %p101, %p102
      %p104 = scmp.ne.s32.totalorder %s96, %s99
      %p105 = scmp.eq.s32.totalorder %s22, 0
      %p106 = por %p104, %p105
      %p107 = scmp.ne.s32.totalorder %s96, %s99
      %p108 = scmp.eq.s32.totalorder %s27, 7
      %p109 = por %p107, %p108
      %p110 = scmp.ne.s32.totalorder %s99, %s100
      %p111 = scmp.eq.s32.totalorder %s27, 0
      %p112 = por %p110, %p111
      %p113 = scmp.ne.s32.totalorder %s99, %s100
      %p114 = scmp.eq.s32.totalorder %s28, 7
      %p115 = por %p113, %p114
      %p117 = scmp.ne.s32.totalorder %s100, %s116
      %p118 = scmp.eq.s32.totalorder %s28, 0
      %p119 = por %p117, %p118
      %s120 = ssub.s32 %s30, %s37
      %p121 = scmp.eq.s32.totalorder %s120, 0
      %s123 = sadd.s32 %s122, 1
      %s124 = scalar_select %p121, %s122, %s123
      %p127 = pneg %p121
      %p128 = scmp.eq.s32.totalorder %s22, 7
      %p129 = por %p127, %p128
      %p130 = scmp.ne.s32.totalorder %s122, %s125
      %p131 = scmp.eq.s32.totalorder %s22, 0
      %p132 = por %p130, %p131
      %p133 = scmp.ne.s32.totalorder %s122, %s125
      %p134 = scmp.eq.s32.totalorder %s27, 7
      %p135 = por %p133, %p134
      %p136 = scmp.ne.s32.totalorder %s125, %s126
      %p137 = scmp.eq.s32.totalorder %s27, 0
      %p138 = por %p136, %p137
      %p139 = scmp.ne.s32.totalorder %s125, %s126
      %p140 = scmp.eq.s32.totalorder %s28, 7
      %p141 = por %p139, %p140
      %p143 = scmp.ne.s32.totalorder %s126, %s142
      %p144 = scmp.eq.s32.totalorder %s28, 0
      %p145 = por %p143, %p144
      %s146 = ssub.s32 %s29, %s41
      %p147 = scmp.eq.s32.totalorder %s146, 0
      %s149 = sadd.s32 %s148, 1
      %s150 = scalar_select %p147, %s148, %s149
      %p153 = pneg %p147
      %p154 = scmp.eq.s32.totalorder %s22, 7
      %p155 = por %p153, %p154
      %p156 = scmp.ne.s32.totalorder %s148, %s151
      %p157 = scmp.eq.s32.totalorder %s22, 0
      %p158 = por %p156, %p157
      %p159 = scmp.ne.s32.totalorder %s148, %s151
      %p160 = scmp.eq.s32.totalorder %s27, 7
      %p161 = por %p159, %p160
      %p162 = scmp.ne.s32.totalorder %s151, %s152
      %p163 = scmp.eq.s32.totalorder %s27, 0
      %p164 = por %p162, %p163
      %p165 = scmp.ne.s32.totalorder %s151, %s152
      %p166 = scmp.eq.s32.totalorder %s28, 7
      %p167 = por %p165, %p166
      %p169 = scmp.ne.s32.totalorder %s152, %s168
      %p170 = scmp.eq.s32.totalorder %s28, 0
      %p171 = por %p169, %p170
      %p172 = scmp.le.s32.totalorder 1, %s22
      %p173 = scmp.lt.s32.totalorder %s22, 9
      %p174 = pnand %p172, %p173
      %p175 = pneg %p174
      // Predicated region
      $region9: #{tpu_custom_call.1} parent=5 // pred_check
        _
      $region10: #{tpu_custom_call.1} parent=5 // pred_check_branch
        %177 = sbr.rel (%p174) target = $region12
      $region11: #{tpu_custom_call.1} parent=5 // pred_region
        %s178 = ssub.s32 %s22, 1
      $region12: #{tpu_custom_call.1} parent=5 // pred_fallthru
        _
      %p179 = scmp.lt.s32.totalorder %s22, 8
      // Predicated region
      $region13: #{tpu_custom_call.1} parent=5 // pred_check
        %p180 = pneg %p179
      $region14: #{tpu_custom_call.1} parent=5 // pred_check_branch
        %182 = sbr.rel (%p180) target = $region16
      $region15: #{tpu_custom_call.1} parent=5 // pred_region
        // Predicated region
        $region17: #{tpu_custom_call.1} parent=15 // pred_check
          %p183 = pneg %p54
        $region18: #{tpu_custom_call.1} parent=15 // pred_check_branch
          %185 = sbr.rel (%p183) target = $region20
        $region19: #{tpu_custom_call.1} parent=15 // pred_region
          %s186 = sand.u32 %s44, 1
          %s187 = scalar_lea.sflag [#allocation4], %s186
          %s188 = sand.u32 %s44, 1
          %s189 = smul.addr %s188, 256
          %s190 = scalar_lea.vmem [#allocation3], %s189
          %s192 = ssub.s32 4096, 4096
          %193 = vsyncadd %s187, %s192
          %s194 = smul.addr %s29, 32
          %s195 = smul.addr %s194, 128
          %s196 = scalar_lea.hbm %s0, %s195
          %s197 = sshll.u32 %s190, 4
          %s198 = int_to_ptr.vmem [resolvable:$true] %s197
          %203 = dma.hbm_to_vmem [thread:$0]  %s196, 4096, %s198, %s187, 256, 256, 16
        $region20: #{tpu_custom_call.1} parent=15 // pred_fallthru
          _
        // Predicated region
        $region21: #{tpu_custom_call.1} parent=15 // pred_check
          %p204 = pneg %p80
        $region22: #{tpu_custom_call.1} parent=15 // pred_check_branch
          %206 = sbr.rel (%p204) target = $region24
        $region23: #{tpu_custom_call.1} parent=15 // pred_region
          %s207 = sand.u32 %s22, 1
          %s208 = scalar_lea.sflag [#allocation7], %s207
          %s209 = sand.u32 %s70, 1
          %s210 = smul.addr %s209, 768
          %s211 = scalar_lea.vmem [#allocation6], %s210
          %s213 = ssub.s32 12288, 12288
          %214 = vsyncadd %s208, %s213
          %s215 = smul.addr %s30, 96
          %s216 = smul.addr %s215, 128
          %s217 = scalar_lea.hbm %s1, %s216
          %s218 = sshll.u32 %s211, 4
          %s219 = int_to_ptr.vmem [resolvable:$true] %s218
          %224 = dma.hbm_to_vmem [thread:$0]  %s217, 12288, %s219, %s208, 384, 384, 24
        $region24: #{tpu_custom_call.1} parent=15 // pred_fallthru
          _
        // Predicated region
        $region25: #{tpu_custom_call.1} parent=15 // pred_check
          %p225 = pneg %p106
        $region26: #{tpu_custom_call.1} parent=15 // pred_check_branch
          %227 = sbr.rel (%p225) target = $region28
        $region27: #{tpu_custom_call.1} parent=15 // pred_region
          %s228 = sand.u32 %s22, 1
          %s229 = scalar_lea.sflag [#allocation7], %s228
          %s230 = sand.u32 %s96, 1
          %s231 = smul.addr %s230, 256
          %s232 = scalar_lea.vmem [#allocation8], %s231
          %s234 = ssub.s32 4096, 4096
          %235 = vsyncadd %s229, %s234
          %s236 = smul.addr %s30, 32
          %s237 = smul.addr %s236, 128
          %s238 = scalar_lea.hbm %s2, %s237
          %s239 = sshll.u32 %s232, 4
          %s240 = int_to_ptr.vmem [resolvable:$true] %s239
          %245 = dma.hbm_to_vmem [thread:$0]  %s238, 4096, %s240, %s229, 256, 256, 16
        $region28: #{tpu_custom_call.1} parent=15 // pred_fallthru
          _
        // Predicated region
        $region29: #{tpu_custom_call.1} parent=15 // pred_check
          %p246 = pneg %p132
        $region30: #{tpu_custom_call.1} parent=15 // pred_check_branch
          %248 = sbr.rel (%p246) target = $region32
        $region31: #{tpu_custom_call.1} parent=15 // pred_region
          %s249 = sand.u32 %s122, 1
          %s250 = scalar_lea.sflag [#allocation10], %s249
          %s251 = sand.u32 %s122, 1
          %s252 = smul.addr %s251, 128
          %s253 = scalar_lea.vmem [#allocation9], %s252
          %s255 = ssub.s32 2048, 2048
          %256 = vsyncadd %s250, %s255
          %s257 = smul.addr %s30, 16
          %s258 = smul.addr %s257, 128
          %s259 = scalar_lea.hbm %s3, %s258
          %s260 = sshll.u32 %s253, 4
          %s261 = int_to_ptr.vmem [resolvable:$true] %s260
          %266 = dma.hbm_to_vmem [thread:$0]  %s259, 2048, %s261, %s250, 128, 128, 8
        $region32: #{tpu_custom_call.1} parent=15 // pred_fallthru
          _
      $region16: #{tpu_custom_call.1} parent=5 // pred_fallthru
        _
      %p267 = scmp.le.s32.totalorder 1, %s22
      %p268 = scmp.lt.s32.totalorder %s22, 9
      %p269 = pnand %p267, %p268
      %p270 = pneg %p269
      // Predicated region
      $region33: #{tpu_custom_call.1} parent=5 // pred_check
        _
      $region34: #{tpu_custom_call.1} parent=5 // pred_check_branch
        %272 = sbr.rel (%p269) target = $region36
      $region35: #{tpu_custom_call.1} parent=5 // pred_region
        %s273 = ssub.s32 %s22, 1
        %s274 = sand.u32 %s47, 1
        %s275 = scalar_lea.sflag [#allocation4], %s274
        %s276 = sand.u32 %s47, 1
        %s277 = smul.addr %s276, 256
        %s278 = scalar_lea.vmem [#allocation3], %s277
        // Predicated region
        $region37: #{tpu_custom_call.1} parent=35 // pred_check
          %p279 = pneg %p60
        $region38: #{tpu_custom_call.1} parent=35 // pred_check_branch
          %281 = sbr.rel (%p279) target = $region40
        $region39: #{tpu_custom_call.1} parent=35 // pred_region
          %282 = dma.done %s275, 4096
        $region40: #{tpu_custom_call.1} parent=35 // pred_fallthru
          _
        %s283 = sand.u32 %s27, 1
        %s284 = scalar_lea.sflag [#allocation7], %s283
        %s285 = sand.u32 %s73, 1
        %s286 = smul.addr %s285, 768
        %s287 = scalar_lea.vmem [#allocation6], %s286
        // Predicated region
        $region41: #{tpu_custom_call.1} parent=35 // pred_check
          %p288 = pneg %p86
        $region42: #{tpu_custom_call.1} parent=35 // pred_check_branch
          %290 = sbr.rel (%p288) target = $region44
        $region43: #{tpu_custom_call.1} parent=35 // pred_region
          %291 = dma.done %s284, 12288
        $region44: #{tpu_custom_call.1} parent=35 // pred_fallthru
          _
        %s292 = sand.u32 %s27, 1
        %s293 = scalar_lea.sflag [#allocation7], %s292
        %s294 = sand.u32 %s99, 1
        %s295 = smul.addr %s294, 256
        %s296 = scalar_lea.vmem [#allocation8], %s295
        // Predicated region
        $region45: #{tpu_custom_call.1} parent=35 // pred_check
          %p297 = pneg %p112
        $region46: #{tpu_custom_call.1} parent=35 // pred_check_branch
          %299 = sbr.rel (%p297) target = $region48
        $region47: #{tpu_custom_call.1} parent=35 // pred_region
          %300 = dma.done %s293, 4096
        $region48: #{tpu_custom_call.1} parent=35 // pred_fallthru
          _
        %s301 = sand.u32 %s125, 1
        %s302 = scalar_lea.sflag [#allocation10], %s301
        %s303 = sand.u32 %s125, 1
        %s304 = smul.addr %s303, 128
        %s305 = scalar_lea.vmem [#allocation9], %s304
        // Predicated region
        $region49: #{tpu_custom_call.1} parent=35 // pred_check
          %p306 = pneg %p138
        $region50: #{tpu_custom_call.1} parent=35 // pred_check_branch
          %308 = sbr.rel (%p306) target = $region52
        $region51: #{tpu_custom_call.1} parent=35 // pred_region
          %309 = dma.done %s302, 2048
        $region52: #{tpu_custom_call.1} parent=35 // pred_fallthru
          _
        %s310 = sand.u32 %s47, 1
        %s311 = scalar_lea.sflag [#allocation4], %s310
        %s312 = sand.u32 %s47, 1
        %s313 = smul.addr %s312, 256
        %s314 = scalar_lea.vmem [#allocation3], %s313
        %p315 = pneg %p60
        %p316 = pneg %p57
        %s317 = sand.u32 %s27, 1
        %s318 = scalar_lea.sflag [#allocation7], %s317
        %s319 = sand.u32 %s73, 1
        %s320 = smul.addr %s319, 768
        %s321 = scalar_lea.vmem [#allocation6], %s320
        %p322 = pneg %p86
        %p323 = pneg %p83
        %s324 = sand.u32 %s27, 1
        %s325 = scalar_lea.sflag [#allocation7], %s324
        %s326 = sand.u32 %s99, 1
        %s327 = smul.addr %s326, 256
        %s328 = scalar_lea.vmem [#allocation8], %s327
        %p329 = pneg %p112
        %p330 = pneg %p109
        %s331 = sand.u32 %s125, 1
        %s332 = scalar_lea.sflag [#allocation10], %s331
        %s333 = sand.u32 %s125, 1
        %s334 = smul.addr %s333, 128
        %s335 = scalar_lea.vmem [#allocation9], %s334
        %p336 = pneg %p138
        %p337 = pneg %p135
        %p338 = pneg %p164
        %p339 = pneg %p161
        %s340 = sand.u32 %s151, 1
        %s341 = scalar_lea.sflag [#allocation5], %s340
        %s342 = sand.u32 %s151, 1
        %s343 = smul.addr %s342, 256
        %s344 = scalar_lea.vmem [#allocation11], %s343
        %p345 = scmp.eq.s32.totalorder %s32, 0
        // Predicated region
        $region53: #{tpu_custom_call.1} parent=35 // pred_check
          %p346 = pneg %p345
        $region54: #{tpu_custom_call.1} parent=35 // pred_check_branch
          %348 = sbr.rel (%p346) target = $region56
        $region55: #{tpu_custom_call.1} parent=35 // pred_region
          %349 = vst [vmem:[#allocation2] sm:$0xff] 0.0
          %350 = vst [vmem:[#allocation2 + $0x8] sm:$0xff] 0.0
          %351 = vst [vmem:[#allocation2 + $0x10] sm:$0xff] 0.0
          %352 = vst [vmem:[#allocation2 + $0x18] sm:$0xff] 0.0
          %353 = vst [vmem:[#allocation2 + $0x20] sm:$0xff] 0.0
          %354 = vst [vmem:[#allocation2 + $0x28] sm:$0xff] 0.0
          %355 = vst [vmem:[#allocation2 + $0x30] sm:$0xff] 0.0
          %356 = vst [vmem:[#allocation2 + $0x38] sm:$0xff] 0.0
          %357 = vst [vmem:[#allocation2 + $0x40] sm:$0xff] 0.0
          %358 = vst [vmem:[#allocation2 + $0x48] sm:$0xff] 0.0
          %359 = vst [vmem:[#allocation2 + $0x50] sm:$0xff] 0.0
          %360 = vst [vmem:[#allocation2 + $0x58] sm:$0xff] 0.0
          %361 = vst [vmem:[#allocation2 + $0x60] sm:$0xff] 0.0
          %362 = vst [vmem:[#allocation2 + $0x68] sm:$0xff] 0.0
          %363 = vst [vmem:[#allocation2 + $0x70] sm:$0xff] 0.0
          %364 = vst [vmem:[#allocation2 + $0x78] sm:$0xff] 0.0
          %365 = vst [vmem:[#allocation2 + $0x80] sm:$0xff] 0.0
          %366 = vst [vmem:[#allocation2 + $0x88] sm:$0xff] 0.0
          %367 = vst [vmem:[#allocation2 + $0x90] sm:$0xff] 0.0
          %368 = vst [vmem:[#allocation2 + $0x98] sm:$0xff] 0.0
          %369 = vst [vmem:[#allocation2 + $0xa0] sm:$0xff] 0.0
          %370 = vst [vmem:[#allocation2 + $0xa8] sm:$0xff] 0.0
          %371 = vst [vmem:[#allocation2 + $0xb0] sm:$0xff] 0.0
          %372 = vst [vmem:[#allocation2 + $0xb8] sm:$0xff] 0.0
          %373 = vst [vmem:[#allocation2 + $0xc0] sm:$0xff] 0.0
          %374 = vst [vmem:[#allocation2 + $0xc8] sm:$0xff] 0.0
          %375 = vst [vmem:[#allocation2 + $0xd0] sm:$0xff] 0.0
          %376 = vst [vmem:[#allocation2 + $0xd8] sm:$0xff] 0.0
          %377 = vst [vmem:[#allocation2 + $0xe0] sm:$0xff] 0.0
          %378 = vst [vmem:[#allocation2 + $0xe8] sm:$0xff] 0.0
          %379 = vst [vmem:[#allocation2 + $0xf0] sm:$0xff] 0.0
          %380 = vst [vmem:[#allocation2 + $0xf8] sm:$0xff] 0.0
        $region56: #{tpu_custom_call.1} parent=35 // pred_fallthru
          _
        %v381 = vld [vmem:[%s278] sm:$0xff]
        %v382 = vld [vmem:[%s278 + $0x8] sm:$0xff]
        %v383 = vld [vmem:[%s278 + $0x10] sm:$0xff]
        %v384 = vld [vmem:[%s278 + $0x18] sm:$0xff]
        %v385 = vld [vmem:[%s278 + $0x20] sm:$0xff]
        %v386 = vld [vmem:[%s278 + $0x28] sm:$0xff]
        %v387 = vld [vmem:[%s278 + $0x30] sm:$0xff]
        %v388 = vld [vmem:[%s278 + $0x38] sm:$0xff]
        %v389 = vld [vmem:[%s278 + $0x40] sm:$0xff]
        %v390 = vld [vmem:[%s278 + $0x48] sm:$0xff]
        %v391 = vld [vmem:[%s278 + $0x50] sm:$0xff]
        %v392 = vld [vmem:[%s278 + $0x58] sm:$0xff]
        %v393 = vld [vmem:[%s278 + $0x60] sm:$0xff]
        %v394 = vld [vmem:[%s278 + $0x68] sm:$0xff]
        %v395 = vld [vmem:[%s278 + $0x70] sm:$0xff]
        %v396 = vld [vmem:[%s278 + $0x78] sm:$0xff]
        %v397 = vld [vmem:[%s278 + $0x80] sm:$0xff]
        %v398 = vld [vmem:[%s278 + $0x88] sm:$0xff]
        %v399 = vld [vmem:[%s278 + $0x90] sm:$0xff]
        %v400 = vld [vmem:[%s278 + $0x98] sm:$0xff]
        %v401 = vld [vmem:[%s278 + $0xa0] sm:$0xff]
        %v402 = vld [vmem:[%s278 + $0xa8] sm:$0xff]
        %v403 = vld [vmem:[%s278 + $0xb0] sm:$0xff]
        %v404 = vld [vmem:[%s278 + $0xb8] sm:$0xff]
        %v405 = vld [vmem:[%s278 + $0xc0] sm:$0xff]
        %v406 = vld [vmem:[%s278 + $0xc8] sm:$0xff]
        %v407 = vld [vmem:[%s278 + $0xd0] sm:$0xff]
        %v408 = vld [vmem:[%s278 + $0xd8] sm:$0xff]
        %v409 = vld [vmem:[%s278 + $0xe0] sm:$0xff]
        %v410 = vld [vmem:[%s278 + $0xe8] sm:$0xff]
        %v411 = vld [vmem:[%s278 + $0xf0] sm:$0xff]
        %v412 = vld [vmem:[%s278 + $0xf8] sm:$0xff]
        %v413 = vld [vmem:[%s287] sm:$0xff]
        %v414 = vld [vmem:[%s287 + $0x8] sm:$0xff]
        %v415 = vld [vmem:[%s287 + $0x10] sm:$0xff]
        %v416 = vld [vmem:[%s287 + $0x18] sm:$0xff]
        %v417 = vld [vmem:[%s287 + $0x20] sm:$0xff]
        %v418 = vld [vmem:[%s287 + $0x28] sm:$0xff]
        %v419 = vld [vmem:[%s287 + $0x30] sm:$0xff]
        %v420 = vld [vmem:[%s287 + $0x38] sm:$0xff]
        %v421 = vld [vmem:[%s287 + $0x40] sm:$0xff]
        %v422 = vld [vmem:[%s287 + $0x48] sm:$0xff]
        %v423 = vld [vmem:[%s287 + $0x50] sm:$0xff]
        %v424 = vld [vmem:[%s287 + $0x58] sm:$0xff]
        %v425 = vld [vmem:[%s287 + $0x60] sm:$0xff]
        %v426 = vld [vmem:[%s287 + $0x68] sm:$0xff]
        %v427 = vld [vmem:[%s287 + $0x70] sm:$0xff]
        %v428 = vld [vmem:[%s287 + $0x78] sm:$0xff]
        %v429 = vld [vmem:[%s287 + $0x80] sm:$0xff]
        %v430 = vld [vmem:[%s287 + $0x88] sm:$0xff]
        %v431 = vld [vmem:[%s287 + $0x90] sm:$0xff]
        %v432 = vld [vmem:[%s287 + $0x98] sm:$0xff]
        %v433 = vld [vmem:[%s287 + $0xa0] sm:$0xff]
        %v434 = vld [vmem:[%s287 + $0xa8] sm:$0xff]
        %v435 = vld [vmem:[%s287 + $0xb0] sm:$0xff]
        %v436 = vld [vmem:[%s287 + $0xb8] sm:$0xff]
        %v437 = vld [vmem:[%s287 + $0xc0] sm:$0xff]
        %v438 = vld [vmem:[%s287 + $0xc8] sm:$0xff]
        %v439 = vld [vmem:[%s287 + $0xd0] sm:$0xff]
        %v440 = vld [vmem:[%s287 + $0xd8] sm:$0xff]
        %v441 = vld [vmem:[%s287 + $0xe0] sm:$0xff]
        %v442 = vld [vmem:[%s287 + $0xe8] sm:$0xff]
        %v443 = vld [vmem:[%s287 + $0xf0] sm:$0xff]
        %v444 = vld [vmem:[%s287 + $0xf8] sm:$0xff]
        %v445 = vld [vmem:[%s287 + $0x100] sm:$0xff]
        %v446 = vld [vmem:[%s287 + $0x108] sm:$0xff]
        %v447 = vld [vmem:[%s287 + $0x110] sm:$0xff]
        %v448 = vld [vmem:[%s287 + $0x118] sm:$0xff]
        %v449 = vld [vmem:[%s287 + $0x120] sm:$0xff]
        %v450 = vld [vmem:[%s287 + $0x128] sm:$0xff]
        %v451 = vld [vmem:[%s287 + $0x130] sm:$0xff]
        %v452 = vld [vmem:[%s287 + $0x138] sm:$0xff]
        %v453 = vld [vmem:[%s287 + $0x140] sm:$0xff]
        %v454 = vld [vmem:[%s287 + $0x148] sm:$0xff]
        %v455 = vld [vmem:[%s287 + $0x150] sm:$0xff]
        %v456 = vld [vmem:[%s287 + $0x158] sm:$0xff]
        %v457 = vld [vmem:[%s287 + $0x160] sm:$0xff]
        %v458 = vld [vmem:[%s287 + $0x168] sm:$0xff]
        %v459 = vld [vmem:[%s287 + $0x170] sm:$0xff]
        %v460 = vld [vmem:[%s287 + $0x178] sm:$0xff]
        %v461 = vld [vmem:[%s287 + $0x180] sm:$0xff]
        %v462 = vld [vmem:[%s287 + $0x188] sm:$0xff]
        %v463 = vld [vmem:[%s287 + $0x190] sm:$0xff]
        %v464 = vld [vmem:[%s287 + $0x198] sm:$0xff]
        %v465 = vld [vmem:[%s287 + $0x1a0] sm:$0xff]
        %v466 = vld [vmem:[%s287 + $0x1a8] sm:$0xff]
        %v467 = vld [vmem:[%s287 + $0x1b0] sm:$0xff]
        %v468 = vld [vmem:[%s287 + $0x1b8] sm:$0xff]
        %v469 = vld [vmem:[%s287 + $0x1c0] sm:$0xff]
        %v470 = vld [vmem:[%s287 + $0x1c8] sm:$0xff]
        %v471 = vld [vmem:[%s287 + $0x1d0] sm:$0xff]
        %v472 = vld [vmem:[%s287 + $0x1d8] sm:$0xff]
        %v473 = vld [vmem:[%s287 + $0x1e0] sm:$0xff]
        %v474 = vld [vmem:[%s287 + $0x1e8] sm:$0xff]
        %v475 = vld [vmem:[%s287 + $0x1f0] sm:$0xff]
        %v476 = vld [vmem:[%s287 + $0x1f8] sm:$0xff]
        %v477 = vld [vmem:[%s287 + $0x200] sm:$0xff]
        %v478 = vld [vmem:[%s287 + $0x208] sm:$0xff]
        %v479 = vld [vmem:[%s287 + $0x210] sm:$0xff]
        %v480 = vld [vmem:[%s287 + $0x218] sm:$0xff]
        %v481 = vld [vmem:[%s287 + $0x220] sm:$0xff]
        %v482 = vld [vmem:[%s287 + $0x228] sm:$0xff]
        %v483 = vld [vmem:[%s287 + $0x230] sm:$0xff]
        %v484 = vld [vmem:[%s287 + $0x238] sm:$0xff]
        %v485 = vld [vmem:[%s287 + $0x240] sm:$0xff]
        %v486 = vld [vmem:[%s287 + $0x248] sm:$0xff]
        %v487 = vld [vmem:[%s287 + $0x250] sm:$0xff]
        %v488 = vld [vmem:[%s287 + $0x258] sm:$0xff]
        %v489 = vld [vmem:[%s287 + $0x260] sm:$0xff]
        %v490 = vld [vmem:[%s287 + $0x268] sm:$0xff]
        %v491 = vld [vmem:[%s287 + $0x270] sm:$0xff]
        %v492 = vld [vmem:[%s287 + $0x278] sm:$0xff]
        %v493 = vld [vmem:[%s287 + $0x280] sm:$0xff]
        %v494 = vld [vmem:[%s287 + $0x288] sm:$0xff]
        %v495 = vld [vmem:[%s287 + $0x290] sm:$0xff]
        %v496 = vld [vmem:[%s287 + $0x298] sm:$0xff]
        %v497 = vld [vmem:[%s287 + $0x2a0] sm:$0xff]
        %v498 = vld [vmem:[%s287 + $0x2a8] sm:$0xff]
        %v499 = vld [vmem:[%s287 + $0x2b0] sm:$0xff]
        %v500 = vld [vmem:[%s287 + $0x2b8] sm:$0xff]
        %v501 = vld [vmem:[%s287 + $0x2c0] sm:$0xff]
        %v502 = vld [vmem:[%s287 + $0x2c8] sm:$0xff]
        %v503 = vld [vmem:[%s287 + $0x2d0] sm:$0xff]
        %v504 = vld [vmem:[%s287 + $0x2d8] sm:$0xff]
        %v505 = vld [vmem:[%s287 + $0x2e0] sm:$0xff]
        %v506 = vld [vmem:[%s287 + $0x2e8] sm:$0xff]
        %v507 = vld [vmem:[%s287 + $0x2f0] sm:$0xff]
        %v508 = vld [vmem:[%s287 + $0x2f8] sm:$0xff]
        %509 = vmatprep.subr.mxu0 %v459
        %510 = vmatpush1.msra.mxu0 %v458
        %511 = vmatprep.subr.mxu0 %v456
        %512 = vmatpush1.msra.mxu0 %v455
        %513 = vmatprep.subr.mxu0 %v453
        %514 = vmatpush1.msra.mxu0 %v452
        %515 = vmatprep.subr.mxu0 %v450
        %516 = vmatpush1.msra.mxu0 %v449
        %517 = vmatprep.subr.mxu0 %v447
        %518 = vmatpush1.msra.mxu0 %v446
        %519 = vmatprep.subr.mxu0 %v444
        %520 = vmatpush1.msra.mxu0 %v443
        %521 = vmatprep.subr.mxu0 %v441
        %522 = vmatpush1.msra.mxu0 %v440
        %523 = vmatprep.subr.mxu0 %v438
        %524 = vmatpush1.msra.mxu0 %v437
        %525 = vmatprep.subr.mxu0 %v435
        %526 = vmatpush1.msra.mxu0 %v434
        %527 = vmatprep.subr.mxu0 %v432
        %528 = vmatpush1.msra.mxu0 %v431
        %529 = vmatprep.subr.mxu0 %v429
        %530 = vmatpush1.msra.mxu0 %v428
        %531 = vmatprep.subr.mxu0 %v426
        %532 = vmatpush1.msra.mxu0 %v425
        %533 = vmatprep.subr.mxu0 %v423
        %534 = vmatpush1.msra.mxu0 %v422
        %535 = vmatprep.subr.mxu0 %v420
        %536 = vmatpush1.msra.mxu0 %v419
        %537 = vmatprep.subr.mxu0 %v417
        %538 = vmatpush1.msra.mxu0 %v416
        %539 = vmatprep.subr.mxu0 %v414
        %540 = vmatpush1.msra.mxu0 %v413
        %541 = vmatprep.subr.mxu0 %v507
        %542 = vmatpush2.msra.mxu0 %v506
        %543 = vmatprep.subr.mxu0 %v504
        %544 = vmatpush2.msra.mxu0 %v503
        %545 = vmatprep.subr.mxu0 %v501
        %546 = vmatpush2.msra.mxu0 %v500
        %547 = vmatprep.subr.mxu0 %v498
        %548 = vmatpush2.msra.mxu0 %v497
        %549 = vmatprep.subr.mxu0 %v495
        %550 = vmatpush2.msra.mxu0 %v494
        %551 = vmatprep.subr.mxu0 %v492
        %552 = vmatpush2.msra.mxu0 %v491
        %553 = vmatprep.subr.mxu0 %v489
        %554 = vmatpush2.msra.mxu0 %v488
        %555 = vmatprep.subr.mxu0 %v486
        %556 = vmatpush2.msra.mxu0 %v485
        %557 = vmatprep.subr.mxu0 %v483
        %558 = vmatpush2.msra.mxu0 %v482
        %559 = vmatprep.subr.mxu0 %v480
        %560 = vmatpush2.msra.mxu0 %v479
        %561 = vmatprep.subr.mxu0 %v477
        %562 = vmatpush2.msra.mxu0 %v476
        %563 = vmatprep.subr.mxu0 %v474
        %564 = vmatpush2.msra.mxu0 %v473
        %565 = vmatprep.subr.mxu0 %v471
        %566 = vmatpush2.msra.mxu0 %v470
        %567 = vmatprep.subr.mxu0 %v468
        %568 = vmatpush2.msra.mxu0 %v467
        %569 = vmatprep.subr.mxu0 %v465
        %570 = vmatpush2.msra.mxu0 %v464
        %571 = vmatprep.subr.mxu0 %v462
        %572 = vmatpush2.msra.mxu0 %v461
        %573 = vmatprep.mubr.f32.mxu0 %v382
        %574 = vmatmul.mubr.f32.gmra.mxu0 %v381
        %v575 = vpop.f32.mrf.mxu0
        %v576 = vadd.f32 0.0, %v575
        %v577 = vpop.f32.mrf.mxu0
        %v578 = vadd.f32 0.0, %v577
        %579 = vmatprep.mubr.f32.mxu0 %v384
        %580 = vmatmul.mubr.f32.gmra.mxu0 %v383
        %v581 = vpop.f32.mrf.mxu0
        %v582 = vadd.f32 0.0, %v581
        %v583 = vpop.f32.mrf.mxu0
        %v584 = vadd.f32 0.0, %v583
        %585 = vmatprep.mubr.f32.mxu0 %v386
        %586 = vmatmul.mubr.f32.gmra.mxu0 %v385
        %v587 = vpop.f32.mrf.mxu0
        %v588 = vadd.f32 0.0, %v587
        %v589 = vpop.f32.mrf.mxu0
        %v590 = vadd.f32 0.0, %v589
        %591 = vmatprep.mubr.f32.mxu0 %v388
        %592 = vmatmul.mubr.f32.gmra.mxu0 %v387
        %v593 = vpop.f32.mrf.mxu0
        %v594 = vadd.f32 0.0, %v593
        %v595 = vpop.f32.mrf.mxu0
        %v596 = vadd.f32 0.0, %v595
        %597 = vmatprep.mubr.f32.mxu0 %v390
        %598 = vmatmul.mubr.f32.gmra.mxu0 %v389
        %v599 = vpop.f32.mrf.mxu0
        %v600 = vadd.f32 0.0, %v599
        %v601 = vpop.f32.mrf.mxu0
        %v602 = vadd.f32 0.0, %v601
        %603 = vmatprep.mubr.f32.mxu0 %v392
        %604 = vmatmul.mubr.f32.gmra.mxu0 %v391
        %v605 = vpop.f32.mrf.mxu0
        %v606 = vadd.f32 0.0, %v605
        %v607 = vpop.f32.mrf.mxu0
        %v608 = vadd.f32 0.0, %v607
        %609 = vmatprep.mubr.f32.mxu0 %v394
        %610 = vmatmul.mubr.f32.gmra.mxu0 %v393
        %v611 = vpop.f32.mrf.mxu0
        %v612 = vadd.f32 0.0, %v611
        %v613 = vpop.f32.mrf.mxu0
        %v614 = vadd.f32 0.0, %v613
        %615 = vmatprep.mubr.f32.mxu0 %v396
        %616 = vmatmul.mubr.f32.gmra.mxu0 %v395
        %v617 = vpop.f32.mrf.mxu0
        %v618 = vadd.f32 0.0, %v617
        %v619 = vpop.f32.mrf.mxu0
        %v620 = vadd.f32 0.0, %v619
        %621 = vmatprep.mubr.f32.mxu0 %v398
        %622 = vmatmul.mubr.f32.gmra.mxu0 %v397
        %v623 = vpop.f32.mrf.mxu0
        %v624 = vadd.f32 0.0, %v623
        %v625 = vpop.f32.mrf.mxu0
        %v626 = vadd.f32 0.0, %v625
        %627 = vmatprep.mubr.f32.mxu0 %v400
        %628 = vmatmul.mubr.f32.gmra.mxu0 %v399
        %v629 = vpop.f32.mrf.mxu0
        %v630 = vadd.f32 0.0, %v629
        %v631 = vpop.f32.mrf.mxu0
        %v632 = vadd.f32 0.0, %v631
        %633 = vmatprep.mubr.f32.mxu0 %v402
        %634 = vmatmul.mubr.f32.gmra.mxu0 %v401
        %v635 = vpop.f32.mrf.mxu0
        %v636 = vadd.f32 0.0, %v635
        %v637 = vpop.f32.mrf.mxu0
        %v638 = vadd.f32 0.0, %v637
        %639 = vmatprep.mubr.f32.mxu0 %v404
        %640 = vmatmul.mubr.f32.gmra.mxu0 %v403
        %v641 = vpop.f32.mrf.mxu0
        %v642 = vadd.f32 0.0, %v641
        %v643 = vpop.f32.mrf.mxu0
        %v644 = vadd.f32 0.0, %v643
        %645 = vmatprep.mubr.f32.mxu0 %v406
        %646 = vmatmul.mubr.f32.gmra.mxu0 %v405
        %v647 = vpop.f32.mrf.mxu0
        %v648 = vadd.f32 0.0, %v647
        %v649 = vpop.f32.mrf.mxu0
        %v650 = vadd.f32 0.0, %v649
        %651 = vmatprep.mubr.f32.mxu0 %v408
        %652 = vmatmul.mubr.f32.gmra.mxu0 %v407
        %v653 = vpop.f32.mrf.mxu0
        %v654 = vadd.f32 0.0, %v653
        %v655 = vpop.f32.mrf.mxu0
        %v656 = vadd.f32 0.0, %v655
        %657 = vmatprep.mubr.f32.mxu0 %v410
        %658 = vmatmul.mubr.f32.gmra.mxu0 %v409
        %v659 = vpop.f32.mrf.mxu0
        %v660 = vadd.f32 0.0, %v659
        %v661 = vpop.f32.mrf.mxu0
        %v662 = vadd.f32 0.0, %v661
        %663 = vmatprep.mubr.f32.mxu0 %v412
        %664 = vmatmul.mubr.f32.gmra.mxu0 %v411
        %v665 = vpop.f32.mrf.mxu0
        %v666 = vadd.f32 0.0, %v665
        %v667 = vpop.f32.mrf.mxu0
        %v668 = vadd.f32 0.0, %v667
        %669 = vdwg.mxu0
        %670 = vmatprep.subr.mxu0 0.0
        %671 = vmatpush1.msra.mxu0 %v460
        %672 = vmatprep.subr.mxu0 0.0
        %673 = vmatpush1.msra.mxu0 %v457
        %674 = vmatprep.subr.mxu0 0.0
        %675 = vmatpush1.msra.mxu0 %v454
        %676 = vmatprep.subr.mxu0 0.0
        %677 = vmatpush1.msra.mxu0 %v451
        %678 = vmatprep.subr.mxu0 0.0
        %679 = vmatpush1.msra.mxu0 %v448
        %680 = vmatprep.subr.mxu0 0.0
        %681 = vmatpush1.msra.mxu0 %v445
        %682 = vmatprep.subr.mxu0 0.0
        %683 = vmatpush1.msra.mxu0 %v442
        %684 = vmatprep.subr.mxu0 0.0
        %685 = vmatpush1.msra.mxu0 %v439
        %686 = vmatprep.subr.mxu0 0.0
        %687 = vmatpush1.msra.mxu0 %v436
        %688 = vmatprep.subr.mxu0 0.0
        %689 = vmatpush1.msra.mxu0 %v433
        %690 = vmatprep.subr.mxu0 0.0
        %691 = vmatpush1.msra.mxu0 %v430
        %692 = vmatprep.subr.mxu0 0.0
        %693 = vmatpush1.msra.mxu0 %v427
        %694 = vmatprep.subr.mxu0 0.0
        %695 = vmatpush1.msra.mxu0 %v424
        %696 = vmatprep.subr.mxu0 0.0
        %697 = vmatpush1.msra.mxu0 %v421
        %698 = vmatprep.subr.mxu0 0.0
        %699 = vmatpush1.msra.mxu0 %v418
        %700 = vmatprep.subr.mxu0 0.0
        %701 = vmatpush1.msra.mxu0 %v415
        %702 = vmatprep.subr.mxu0 0.0
        %703 = vmatpush2.msra.mxu0 %v508
        %704 = vmatprep.subr.mxu0 0.0
        %705 = vmatpush2.msra.mxu0 %v505
        %706 = vmatprep.subr.mxu0 0.0
        %707 = vmatpush2.msra.mxu0 %v502
        %708 = vmatprep.subr.mxu0 0.0
        %709 = vmatpush2.msra.mxu0 %v499
        %710 = vmatprep.subr.mxu0 0.0
        %711 = vmatpush2.msra.mxu0 %v496
        %712 = vmatprep.subr.mxu0 0.0
        %713 = vmatpush2.msra.mxu0 %v493
        %714 = vmatprep.subr.mxu0 0.0
        %715 = vmatpush2.msra.mxu0 %v490
        %716 = vmatprep.subr.mxu0 0.0
        %717 = vmatpush2.msra.mxu0 %v487
        %718 = vmatprep.subr.mxu0 0.0
        %719 = vmatpush2.msra.mxu0 %v484
        %720 = vmatprep.subr.mxu0 0.0
        %721 = vmatpush2.msra.mxu0 %v481
        %722 = vmatprep.subr.mxu0 0.0
        %723 = vmatpush2.msra.mxu0 %v478
        %724 = vmatprep.subr.mxu0 0.0
        %725 = vmatpush2.msra.mxu0 %v475
        %726 = vmatprep.subr.mxu0 0.0
        %727 = vmatpush2.msra.mxu0 %v472
        %728 = vmatprep.subr.mxu0 0.0
        %729 = vmatpush2.msra.mxu0 %v469
        %730 = vmatprep.subr.mxu0 0.0
        %731 = vmatpush2.msra.mxu0 %v466
        %732 = vmatprep.subr.mxu0 0.0
        %733 = vmatpush2.msra.mxu0 %v463
        %734 = vmatprep.mubr.f32.mxu0 %v382
        %735 = vmatmul.mubr.f32.gmra.mxu0 %v381
        %v736 = vpop.f32.mrf.mxu0
        %v737 = vadd.f32 0.0, %v736
        %v738 = vpop.f32.mrf.mxu0
        %739 = vmatprep.mubr.f32.mxu0 %v384
        %740 = vmatmul.mubr.f32.gmra.mxu0 %v383
        %v741 = vpop.f32.mrf.mxu0
        %v742 = vadd.f32 0.0, %v741
        %v743 = vpop.f32.mrf.mxu0
        %744 = vmatprep.mubr.f32.mxu0 %v386
        %745 = vmatmul.mubr.f32.gmra.mxu0 %v385
        %v746 = vpop.f32.mrf.mxu0
        %v747 = vadd.f32 0.0, %v746
        %v748 = vpop.f32.mrf.mxu0
        %749 = vmatprep.mubr.f32.mxu0 %v388
        %750 = vmatmul.mubr.f32.gmra.mxu0 %v387
        %v751 = vpop.f32.mrf.mxu0
        %v752 = vadd.f32 0.0, %v751
        %v753 = vpop.f32.mrf.mxu0
        %754 = vmatprep.mubr.f32.mxu0 %v390
        %755 = vmatmul.mubr.f32.gmra.mxu0 %v389
        %v756 = vpop.f32.mrf.mxu0
        %v757 = vadd.f32 0.0, %v756
        %v758 = vpop.f32.mrf.mxu0
        %759 = vmatprep.mubr.f32.mxu0 %v392
        %760 = vmatmul.mubr.f32.gmra.mxu0 %v391
        %v761 = vpop.f32.mrf.mxu0
        %v762 = vadd.f32 0.0, %v761
        %v763 = vpop.f32.mrf.mxu0
        %764 = vmatprep.mubr.f32.mxu0 %v394
        %765 = vmatmul.mubr.f32.gmra.mxu0 %v393
        %v766 = vpop.f32.mrf.mxu0
        %v767 = vadd.f32 0.0, %v766
        %v768 = vpop.f32.mrf.mxu0
        %769 = vmatprep.mubr.f32.mxu0 %v396
        %770 = vmatmul.mubr.f32.gmra.mxu0 %v395
        %v771 = vpop.f32.mrf.mxu0
        %v772 = vadd.f32 0.0, %v771
        %v773 = vpop.f32.mrf.mxu0
        %774 = vmatprep.mubr.f32.mxu0 %v398
        %775 = vmatmul.mubr.f32.gmra.mxu0 %v397
        %v776 = vpop.f32.mrf.mxu0
        %v777 = vadd.f32 0.0, %v776
        %v778 = vpop.f32.mrf.mxu0
        %779 = vmatprep.mubr.f32.mxu0 %v400
        %780 = vmatmul.mubr.f32.gmra.mxu0 %v399
        %v781 = vpop.f32.mrf.mxu0
        %v782 = vadd.f32 0.0, %v781
        %v783 = vpop.f32.mrf.mxu0
        %784 = vmatprep.mubr.f32.mxu0 %v402
        %785 = vmatmul.mubr.f32.gmra.mxu0 %v401
        %v786 = vpop.f32.mrf.mxu0
        %v787 = vadd.f32 0.0, %v786
        %v788 = vpop.f32.mrf.mxu0
        %789 = vmatprep.mubr.f32.mxu0 %v404
        %790 = vmatmul.mubr.f32.gmra.mxu0 %v403
        %v791 = vpop.f32.mrf.mxu0
        %v792 = vadd.f32 0.0, %v791
        %v793 = vpop.f32.mrf.mxu0
        %794 = vmatprep.mubr.f32.mxu0 %v406
        %795 = vmatmul.mubr.f32.gmra.mxu0 %v405
        %v796 = vpop.f32.mrf.mxu0
        %v797 = vadd.f32 0.0, %v796
        %v798 = vpop.f32.mrf.mxu0
        %799 = vmatprep.mubr.f32.mxu0 %v408
        %800 = vmatmul.mubr.f32.gmra.mxu0 %v407
        %v801 = vpop.f32.mrf.mxu0
        %v802 = vadd.f32 0.0, %v801
        %v803 = vpop.f32.mrf.mxu0
        %804 = vmatprep.mubr.f32.mxu0 %v410
        %805 = vmatmul.mubr.f32.gmra.mxu0 %v409
        %v806 = vpop.f32.mrf.mxu0
        %v807 = vadd.f32 0.0, %v806
        %v808 = vpop.f32.mrf.mxu0
        %809 = vmatprep.mubr.f32.mxu0 %v412
        %810 = vmatmul.mubr.f32.gmra.mxu0 %v411
        %v811 = vpop.f32.mrf.mxu0
        %v812 = vadd.f32 0.0, %v811
        %v813 = vpop.f32.mrf.mxu0
        %814 = vdwg.mxu0
        %v815 = vld [vmem:[%s305] sm:$0xff]
        %v816 = vld [vmem:[%s305 + $0x8] sm:$0xff]
        %v817 = vld [vmem:[%s305 + $0x10] sm:$0xff]
        %v818 = vld [vmem:[%s305 + $0x18] sm:$0xff]
        %v819 = vld [vmem:[%s305 + $0x20] sm:$0xff]
        %v820 = vld [vmem:[%s305 + $0x28] sm:$0xff]
        %v821 = vld [vmem:[%s305 + $0x30] sm:$0xff]
        %v822 = vld [vmem:[%s305 + $0x38] sm:$0xff]
        %v823 = vld [vmem:[%s305 + $0x40] sm:$0xff]
        %v824 = vld [vmem:[%s305 + $0x48] sm:$0xff]
        %v825 = vld [vmem:[%s305 + $0x50] sm:$0xff]
        %v826 = vld [vmem:[%s305 + $0x58] sm:$0xff]
        %v827 = vld [vmem:[%s305 + $0x60] sm:$0xff]
        %v828 = vld [vmem:[%s305 + $0x68] sm:$0xff]
        %v829 = vld [vmem:[%s305 + $0x70] sm:$0xff]
        %v830 = vld [vmem:[%s305 + $0x78] sm:$0xff]
        %831 = vmatprep.subr.mxu0 0.0
        %832 = vmatpush1.xpose.msra.mxu0 %v668
        %833 = vmatprep.subr.mxu0 0.0
        %834 = vmatpush1.xpose.msra.mxu0 %v662
        %835 = vmatprep.subr.mxu0 0.0
        %836 = vmatpush1.xpose.msra.mxu0 %v656
        %837 = vmatprep.subr.mxu0 0.0
        %838 = vmatpush1.xpose.msra.mxu0 %v650
        %839 = vmatprep.subr.mxu0 0.0
        %840 = vmatpush1.xpose.msra.mxu0 %v644
        %841 = vmatprep.subr.mxu0 0.0
        %842 = vmatpush1.xpose.msra.mxu0 %v638
        %843 = vmatprep.subr.mxu0 0.0
        %844 = vmatpush1.xpose.msra.mxu0 %v632
        %845 = vmatprep.subr.mxu0 0.0
        %846 = vmatpush1.xpose.msra.mxu0 %v626
        %847 = vmatprep.subr.mxu0 0.0
        %848 = vmatpush1.xpose.msra.mxu0 %v620
        %849 = vmatprep.subr.mxu0 0.0
        %850 = vmatpush1.xpose.msra.mxu0 %v614
        %851 = vmatprep.subr.mxu0 0.0
        %852 = vmatpush1.xpose.msra.mxu0 %v608
        %853 = vmatprep.subr.mxu0 0.0
        %854 = vmatpush1.xpose.msra.mxu0 %v602
        %855 = vmatprep.subr.mxu0 0.0
        %856 = vmatpush1.xpose.msra.mxu0 %v596
        %857 = vmatprep.subr.mxu0 0.0
        %858 = vmatpush1.xpose.msra.mxu0 %v590
        %859 = vmatprep.subr.mxu0 0.0
        %860 = vmatpush1.xpose.msra.mxu0 %v584
        %861 = vmatprep.subr.mxu0 0.0
        %862 = vmatpush1.xpose.msra.mxu0 %v578
        %863 = vmatprep.subr.mxu0 0.0
        %864 = vmatpush2.xpose.msra.mxu0 0.0
        %865 = vmatprep.subr.mxu0 0.0
        %866 = vmatpush2.xpose.msra.mxu0 0.0
        %867 = vmatprep.subr.mxu0 0.0
        %868 = vmatpush2.xpose.msra.mxu0 0.0
        %869 = vmatprep.subr.mxu0 0.0
        %870 = vmatpush2.xpose.msra.mxu0 0.0
        %871 = vmatprep.subr.mxu0 0.0
        %872 = vmatpush2.xpose.msra.mxu0 0.0
        %873 = vmatprep.subr.mxu0 0.0
        %874 = vmatpush2.xpose.msra.mxu0 0.0
        %875 = vmatprep.subr.mxu0 0.0
        %876 = vmatpush2.xpose.msra.mxu0 0.0
        %877 = vmatprep.subr.mxu0 0.0
        %878 = vmatpush2.xpose.msra.mxu0 0.0
        %879 = vmatprep.subr.mxu0 0.0
        %880 = vmatpush2.xpose.msra.mxu0 0.0
        %881 = vmatprep.subr.mxu0 0.0
        %882 = vmatpush2.xpose.msra.mxu0 0.0
        %883 = vmatprep.subr.mxu0 0.0
        %884 = vmatpush2.xpose.msra.mxu0 0.0
        %885 = vmatprep.subr.mxu0 0.0
        %886 = vmatpush2.xpose.msra.mxu0 0.0
        %887 = vmatprep.subr.mxu0 0.0
        %888 = vmatpush2.xpose.msra.mxu0 0.0
        %889 = vmatprep.subr.mxu0 0.0
        %890 = vmatpush2.xpose.msra.mxu0 0.0
        %891 = vmatprep.subr.mxu0 0.0
        %892 = vmatpush2.xpose.msra.mxu0 0.0
        %893 = vmatprep.subr.mxu0 0.0
        %894 = vmatpush2.xpose.msra.mxu0 0.0
        %895 = vmatprep.mubr.f32.mxu0 0.0
        %896 = vmatmul.mubr.f32.gmra.mxu0 %v576
        %v897 = vpop.f32.mrf.mxu0
        %v898 = vadd.f32 %v815, %v897
        %v899 = vpop.f32.mrf.mxu0
        %900 = vmatprep.mubr.f32.mxu0 0.0
        %901 = vmatmul.mubr.f32.gmra.mxu0 %v582
        %v902 = vpop.f32.mrf.mxu0
        %v903 = vadd.f32 %v816, %v902
        %v904 = vpop.f32.mrf.mxu0
        %905 = vmatprep.mubr.f32.mxu0 0.0
        %906 = vmatmul.mubr.f32.gmra.mxu0 %v588
        %v907 = vpop.f32.mrf.mxu0
        %v908 = vadd.f32 %v817, %v907
        %v909 = vpop.f32.mrf.mxu0
        %910 = vmatprep.mubr.f32.mxu0 0.0
        %911 = vmatmul.mubr.f32.gmra.mxu0 %v594
        %v912 = vpop.f32.mrf.mxu0
        %v913 = vadd.f32 %v818, %v912
        %v914 = vpop.f32.mrf.mxu0
        %915 = vmatprep.mubr.f32.mxu0 0.0
        %916 = vmatmul.mubr.f32.gmra.mxu0 %v600
        %v917 = vpop.f32.mrf.mxu0
        %v918 = vadd.f32 %v819, %v917
        %v919 = vpop.f32.mrf.mxu0
        %920 = vmatprep.mubr.f32.mxu0 0.0
        %921 = vmatmul.mubr.f32.gmra.mxu0 %v606
        %v922 = vpop.f32.mrf.mxu0
        %v923 = vadd.f32 %v820, %v922
        %v924 = vpop.f32.mrf.mxu0
        %925 = vmatprep.mubr.f32.mxu0 0.0
        %926 = vmatmul.mubr.f32.gmra.mxu0 %v612
        %v927 = vpop.f32.mrf.mxu0
        %v928 = vadd.f32 %v821, %v927
        %v929 = vpop.f32.mrf.mxu0
        %930 = vmatprep.mubr.f32.mxu0 0.0
        %931 = vmatmul.mubr.f32.gmra.mxu0 %v618
        %v932 = vpop.f32.mrf.mxu0
        %v933 = vadd.f32 %v822, %v932
        %v934 = vpop.f32.mrf.mxu0
        %935 = vmatprep.mubr.f32.mxu0 0.0
        %936 = vmatmul.mubr.f32.gmra.mxu0 %v624
        %v937 = vpop.f32.mrf.mxu0
        %v938 = vadd.f32 %v823, %v937
        %v939 = vpop.f32.mrf.mxu0
        %940 = vmatprep.mubr.f32.mxu0 0.0
        %941 = vmatmul.mubr.f32.gmra.mxu0 %v630
        %v942 = vpop.f32.mrf.mxu0
        %v943 = vadd.f32 %v824, %v942
        %v944 = vpop.f32.mrf.mxu0
        %945 = vmatprep.mubr.f32.mxu0 0.0
        %946 = vmatmul.mubr.f32.gmra.mxu0 %v636
        %v947 = vpop.f32.mrf.mxu0
        %v948 = vadd.f32 %v825, %v947
        %v949 = vpop.f32.mrf.mxu0
        %950 = vmatprep.mubr.f32.mxu0 0.0
        %951 = vmatmul.mubr.f32.gmra.mxu0 %v642
        %v952 = vpop.f32.mrf.mxu0
        %v953 = vadd.f32 %v826, %v952
        %v954 = vpop.f32.mrf.mxu0
        %955 = vmatprep.mubr.f32.mxu0 0.0
        %956 = vmatmul.mubr.f32.gmra.mxu0 %v648
        %v957 = vpop.f32.mrf.mxu0
        %v958 = vadd.f32 %v827, %v957
        %v959 = vpop.f32.mrf.mxu0
        %960 = vmatprep.mubr.f32.mxu0 0.0
        %961 = vmatmul.mubr.f32.gmra.mxu0 %v654
        %v962 = vpop.f32.mrf.mxu0
        %v963 = vadd.f32 %v828, %v962
        %v964 = vpop.f32.mrf.mxu0
        %965 = vmatprep.mubr.f32.mxu0 0.0
        %966 = vmatmul.mubr.f32.gmra.mxu0 %v660
        %v967 = vpop.f32.mrf.mxu0
        %v968 = vadd.f32 %v829, %v967
        %v969 = vpop.f32.mrf.mxu0
        %970 = vmatprep.mubr.f32.mxu0 0.0
        %971 = vmatmul.mubr.f32.gmra.mxu0 %v666
        %v972 = vpop.f32.mrf.mxu0
        %v973 = vadd.f32 %v830, %v972
        %v974 = vpop.f32.mrf.mxu0
        %975 = vdwg.mxu0
        %976 = vmax.xlane.f32.xlu0 %v898
        %v977 = vpop.xlane.xlu0 %976
        %978 = vmax.xlane.f32.xlu0 %v903
        %v979 = vpop.xlane.xlu0 %978
        %980 = vmax.xlane.f32.xlu0 %v908
        %v981 = vpop.xlane.xlu0 %980
        %982 = vmax.xlane.f32.xlu0 %v913
        %v983 = vpop.xlane.xlu0 %982
        %984 = vmax.xlane.f32.xlu0 %v918
        %v985 = vpop.xlane.xlu0 %984
        %986 = vmax.xlane.f32.xlu0 %v923
        %v987 = vpop.xlane.xlu0 %986
        %988 = vmax.xlane.f32.xlu0 %v928
        %v989 = vpop.xlane.xlu0 %988
        %990 = vmax.xlane.f32.xlu0 %v933
        %v991 = vpop.xlane.xlu0 %990
        %992 = vmax.xlane.f32.xlu0 %v938
        %v993 = vpop.xlane.xlu0 %992
        %994 = vmax.xlane.f32.xlu0 %v943
        %v995 = vpop.xlane.xlu0 %994
        %996 = vmax.xlane.f32.xlu0 %v948
        %v997 = vpop.xlane.xlu0 %996
        %998 = vmax.xlane.f32.xlu0 %v953
        %v999 = vpop.xlane.xlu0 %998
        %1000 = vmax.xlane.f32.xlu0 %v958
        %v1001 = vpop.xlane.xlu0 %1000
        %1002 = vmax.xlane.f32.xlu0 %v963
        %v1003 = vpop.xlane.xlu0 %1002
        %1004 = vmax.xlane.f32.xlu0 %v968
        %v1005 = vpop.xlane.xlu0 %1004
        %1006 = vmax.xlane.f32.xlu0 %v973
        %v1007 = vpop.xlane.xlu0 %1006
        %v1008 = vsub.f32 %v898, %v977
        %v1009 = vsub.f32 %v903, %v979
        %v1010 = vsub.f32 %v908, %v981
        %v1011 = vsub.f32 %v913, %v983
        %v1012 = vsub.f32 %v918, %v985
        %v1013 = vsub.f32 %v923, %v987
        %v1014 = vsub.f32 %v928, %v989
        %v1015 = vsub.f32 %v933, %v991
        %v1016 = vsub.f32 %v938, %v993
        %v1017 = vsub.f32 %v943, %v995
        %v1018 = vsub.f32 %v948, %v997
        %v1019 = vsub.f32 %v953, %v999
        %v1020 = vsub.f32 %v958, %v1001
        %v1021 = vsub.f32 %v963, %v1003
        %v1022 = vsub.f32 %v968, %v1005
        %v1023 = vsub.f32 %v973, %v1007
        %v1024 = vmul.f32 %v1008, 1.442695
        %v1025 = vpow.pop %v1024
        %v1026 = vmul.f32 %v1009, 1.442695
        %v1027 = vpow.pop %v1026
        %v1028 = vmul.f32 %v1010, 1.442695
        %v1029 = vpow.pop %v1028
        %v1030 = vmul.f32 %v1011, 1.442695
        %v1031 = vpow.pop %v1030
        %v1032 = vmul.f32 %v1012, 1.442695
        %v1033 = vpow.pop %v1032
        %v1034 = vmul.f32 %v1013, 1.442695
        %v1035 = vpow.pop %v1034
        %v1036 = vmul.f32 %v1014, 1.442695
        %v1037 = vpow.pop %v1036
        %v1038 = vmul.f32 %v1015, 1.442695
        %v1039 = vpow.pop %v1038
        %v1040 = vmul.f32 %v1016, 1.442695
        %v1041 = vpow.pop %v1040
        %v1042 = vmul.f32 %v1017, 1.442695
        %v1043 = vpow.pop %v1042
        %v1044 = vmul.f32 %v1018, 1.442695
        %v1045 = vpow.pop %v1044
        %v1046 = vmul.f32 %v1019, 1.442695
        %v1047 = vpow.pop %v1046
        %v1048 = vmul.f32 %v1020, 1.442695
        %v1049 = vpow.pop %v1048
        %v1050 = vmul.f32 %v1021, 1.442695
        %v1051 = vpow.pop %v1050
        %v1052 = vmul.f32 %v1022, 1.442695
        %v1053 = vpow.pop %v1052
        %v1054 = vmul.f32 %v1023, 1.442695
        %v1055 = vpow.pop %v1054
        %1056 = vadd.xlane.f32.xlu0 %v1025
        %v1057 = vpop.xlane.xlu0 %1056
        %1058 = vadd.xlane.f32.xlu0 %v1027
        %v1059 = vpop.xlane.xlu0 %1058
        %1060 = vadd.xlane.f32.xlu0 %v1029
        %v1061 = vpop.xlane.xlu0 %1060
        %1062 = vadd.xlane.f32.xlu0 %v1031
        %v1063 = vpop.xlane.xlu0 %1062
        %1064 = vadd.xlane.f32.xlu0 %v1033
        %v1065 = vpop.xlane.xlu0 %1064
        %1066 = vadd.xlane.f32.xlu0 %v1035
        %v1067 = vpop.xlane.xlu0 %1066
        %1068 = vadd.xlane.f32.xlu0 %v1037
        %v1069 = vpop.xlane.xlu0 %1068
        %1070 = vadd.xlane.f32.xlu0 %v1039
        %v1071 = vpop.xlane.xlu0 %1070
        %1072 = vadd.xlane.f32.xlu0 %v1041
        %v1073 = vpop.xlane.xlu0 %1072
        %1074 = vadd.xlane.f32.xlu0 %v1043
        %v1075 = vpop.xlane.xlu0 %1074
        %1076 = vadd.xlane.f32.xlu0 %v1045
        %v1077 = vpop.xlane.xlu0 %1076
        %1078 = vadd.xlane.f32.xlu0 %v1047
        %v1079 = vpop.xlane.xlu0 %1078
        %1080 = vadd.xlane.f32.xlu0 %v1049
        %v1081 = vpop.xlane.xlu0 %1080
        %1082 = vadd.xlane.f32.xlu0 %v1051
        %v1083 = vpop.xlane.xlu0 %1082
        %1084 = vadd.xlane.f32.xlu0 %v1053
        %v1085 = vpop.xlane.xlu0 %1084
        %1086 = vadd.xlane.f32.xlu0 %v1055
        %v1087 = vpop.xlane.xlu0 %1086
        %v1088 = vrcp.pop %v1057
        %v1089 = vmul.f32 %v1025, %v1088
        %v1090 = vrcp.pop %v1059
        %v1091 = vmul.f32 %v1027, %v1090
        %v1092 = vrcp.pop %v1061
        %v1093 = vmul.f32 %v1029, %v1092
        %v1094 = vrcp.pop %v1063
        %v1095 = vmul.f32 %v1031, %v1094
        %v1096 = vrcp.pop %v1065
        %v1097 = vmul.f32 %v1033, %v1096
        %v1098 = vrcp.pop %v1067
        %v1099 = vmul.f32 %v1035, %v1098
        %v1100 = vrcp.pop %v1069
        %v1101 = vmul.f32 %v1037, %v1100
        %v1102 = vrcp.pop %v1071
        %v1103 = vmul.f32 %v1039, %v1102
        %v1104 = vrcp.pop %v1073
        %v1105 = vmul.f32 %v1041, %v1104
        %v1106 = vrcp.pop %v1075
        %v1107 = vmul.f32 %v1043, %v1106
        %v1108 = vrcp.pop %v1077
        %v1109 = vmul.f32 %v1045, %v1108
        %v1110 = vrcp.pop %v1079
        %v1111 = vmul.f32 %v1047, %v1110
        %v1112 = vrcp.pop %v1081
        %v1113 = vmul.f32 %v1049, %v1112
        %v1114 = vrcp.pop %v1083
        %v1115 = vmul.f32 %v1051, %v1114
        %v1116 = vrcp.pop %v1085
        %v1117 = vmul.f32 %v1053, %v1116
        %v1118 = vrcp.pop %v1087
        %v1119 = vmul.f32 %v1055, %v1118
        %1120 = vmatprep.subr.mxu0 0.0
        %1121 = vmatpush1.msra.mxu0 %v812
        %1122 = vmatprep.subr.mxu0 0.0
        %1123 = vmatpush1.msra.mxu0 %v807
        %1124 = vmatprep.subr.mxu0 0.0
        %1125 = vmatpush1.msra.mxu0 %v802
        %1126 = vmatprep.subr.mxu0 0.0
        %1127 = vmatpush1.msra.mxu0 %v797
        %1128 = vmatprep.subr.mxu0 0.0
        %1129 = vmatpush1.msra.mxu0 %v792
        %1130 = vmatprep.subr.mxu0 0.0
        %1131 = vmatpush1.msra.mxu0 %v787
        %1132 = vmatprep.subr.mxu0 0.0
        %1133 = vmatpush1.msra.mxu0 %v782
        %1134 = vmatprep.subr.mxu0 0.0
        %1135 = vmatpush1.msra.mxu0 %v777
        %1136 = vmatprep.subr.mxu0 0.0
        %1137 = vmatpush1.msra.mxu0 %v772
        %1138 = vmatprep.subr.mxu0 0.0
        %1139 = vmatpush1.msra.mxu0 %v767
        %1140 = vmatprep.subr.mxu0 0.0
        %1141 = vmatpush1.msra.mxu0 %v762
        %1142 = vmatprep.subr.mxu0 0.0
        %1143 = vmatpush1.msra.mxu0 %v757
        %1144 = vmatprep.subr.mxu0 0.0
        %1145 = vmatpush1.msra.mxu0 %v752
        %1146 = vmatprep.subr.mxu0 0.0
        %1147 = vmatpush1.msra.mxu0 %v747
        %1148 = vmatprep.subr.mxu0 0.0
        %1149 = vmatpush1.msra.mxu0 %v742
        %1150 = vmatprep.subr.mxu0 0.0
        %1151 = vmatpush1.msra.mxu0 %v737
        %1152 = vmatprep.subr.mxu0 0.0
        %1153 = vmatpush2.msra.mxu0 0.0
        %1154 = vmatprep.subr.mxu0 0.0
        %1155 = vmatpush2.msra.mxu0 0.0
        %1156 = vmatprep.subr.mxu0 0.0
        %1157 = vmatpush2.msra.mxu0 0.0
        %1158 = vmatprep.subr.mxu0 0.0
        %1159 = vmatpush2.msra.mxu0 0.0
        %1160 = vmatprep.subr.mxu0 0.0
        %1161 = vmatpush2.msra.mxu0 0.0
        %1162 = vmatprep.subr.mxu0 0.0
        %1163 = vmatpush2.msra.mxu0 0.0
        %1164 = vmatprep.subr.mxu0 0.0
        %1165 = vmatpush2.msra.mxu0 0.0
        %1166 = vmatprep.subr.mxu0 0.0
        %1167 = vmatpush2.msra.mxu0 0.0
        %1168 = vmatprep.subr.mxu0 0.0
        %1169 = vmatpush2.msra.mxu0 0.0
        %1170 = vmatprep.subr.mxu0 0.0
        %1171 = vmatpush2.msra.mxu0 0.0
        %1172 = vmatprep.subr.mxu0 0.0
        %1173 = vmatpush2.msra.mxu0 0.0
        %1174 = vmatprep.subr.mxu0 0.0
        %1175 = vmatpush2.msra.mxu0 0.0
        %1176 = vmatprep.subr.mxu0 0.0
        %1177 = vmatpush2.msra.mxu0 0.0
        %1178 = vmatprep.subr.mxu0 0.0
        %1179 = vmatpush2.msra.mxu0 0.0
        %1180 = vmatprep.subr.mxu0 0.0
        %1181 = vmatpush2.msra.mxu0 0.0
        %1182 = vmatprep.subr.mxu0 0.0
        %1183 = vmatpush2.msra.mxu0 0.0
        %1184 = vmatprep.mubr.f32.mxu0 0.0
        %1185 = vmatmul.mubr.f32.gmra.mxu0 %v1089
        %v1186 = vpop.f32.mrf.mxu0
        %v1187 = vadd.f32 0.0, %v1186
        %v1188 = vpop.f32.mrf.mxu0
        %1189 = vmatprep.mubr.f32.mxu0 0.0
        %1190 = vmatmul.mubr.f32.gmra.mxu0 %v1091
        %v1191 = vpop.f32.mrf.mxu0
        %v1192 = vadd.f32 0.0, %v1191
        %v1193 = vpop.f32.mrf.mxu0
        %1194 = vmatprep.mubr.f32.mxu0 0.0
        %1195 = vmatmul.mubr.f32.gmra.mxu0 %v1093
        %v1196 = vpop.f32.mrf.mxu0
        %v1197 = vadd.f32 0.0, %v1196
        %v1198 = vpop.f32.mrf.mxu0
        %1199 = vmatprep.mubr.f32.mxu0 0.0
        %1200 = vmatmul.mubr.f32.gmra.mxu0 %v1095
        %v1201 = vpop.f32.mrf.mxu0
        %v1202 = vadd.f32 0.0, %v1201
        %v1203 = vpop.f32.mrf.mxu0
        %1204 = vmatprep.mubr.f32.mxu0 0.0
        %1205 = vmatmul.mubr.f32.gmra.mxu0 %v1097
        %v1206 = vpop.f32.mrf.mxu0
        %v1207 = vadd.f32 0.0, %v1206
        %v1208 = vpop.f32.mrf.mxu0
        %1209 = vmatprep.mubr.f32.mxu0 0.0
        %1210 = vmatmul.mubr.f32.gmra.mxu0 %v1099
        %v1211 = vpop.f32.mrf.mxu0
        %v1212 = vadd.f32 0.0, %v1211
        %v1213 = vpop.f32.mrf.mxu0
        %1214 = vmatprep.mubr.f32.mxu0 0.0
        %1215 = vmatmul.mubr.f32.gmra.mxu0 %v1101
        %v1216 = vpop.f32.mrf.mxu0
        %v1217 = vadd.f32 0.0, %v1216
        %v1218 = vpop.f32.mrf.mxu0
        %1219 = vmatprep.mubr.f32.mxu0 0.0
        %1220 = vmatmul.mubr.f32.gmra.mxu0 %v1103
        %v1221 = vpop.f32.mrf.mxu0
        %v1222 = vadd.f32 0.0, %v1221
        %v1223 = vpop.f32.mrf.mxu0
        %1224 = vmatprep.mubr.f32.mxu0 0.0
        %1225 = vmatmul.mubr.f32.gmra.mxu0 %v1105
        %v1226 = vpop.f32.mrf.mxu0
        %v1227 = vadd.f32 0.0, %v1226
        %v1228 = vpop.f32.mrf.mxu0
        %1229 = vmatprep.mubr.f32.mxu0 0.0
        %1230 = vmatmul.mubr.f32.gmra.mxu0 %v1107
        %v1231 = vpop.f32.mrf.mxu0
        %v1232 = vadd.f32 0.0, %v1231
        %v1233 = vpop.f32.mrf.mxu0
        %1234 = vmatprep.mubr.f32.mxu0 0.0
        %1235 = vmatmul.mubr.f32.gmra.mxu0 %v1109
        %v1236 = vpop.f32.mrf.mxu0
        %v1237 = vadd.f32 0.0, %v1236
        %v1238 = vpop.f32.mrf.mxu0
        %1239 = vmatprep.mubr.f32.mxu0 0.0
        %1240 = vmatmul.mubr.f32.gmra.mxu0 %v1111
        %v1241 = vpop.f32.mrf.mxu0
        %v1242 = vadd.f32 0.0, %v1241
        %v1243 = vpop.f32.mrf.mxu0
        %1244 = vmatprep.mubr.f32.mxu0 0.0
        %1245 = vmatmul.mubr.f32.gmra.mxu0 %v1113
        %v1246 = vpop.f32.mrf.mxu0
        %v1247 = vadd.f32 0.0, %v1246
        %v1248 = vpop.f32.mrf.mxu0
        %1249 = vmatprep.mubr.f32.mxu0 0.0
        %1250 = vmatmul.mubr.f32.gmra.mxu0 %v1115
        %v1251 = vpop.f32.mrf.mxu0
        %v1252 = vadd.f32 0.0, %v1251
        %v1253 = vpop.f32.mrf.mxu0
        %1254 = vmatprep.mubr.f32.mxu0 0.0
        %1255 = vmatmul.mubr.f32.gmra.mxu0 %v1117
        %v1256 = vpop.f32.mrf.mxu0
        %v1257 = vadd.f32 0.0, %v1256
        %v1258 = vpop.f32.mrf.mxu0
        %1259 = vmatprep.mubr.f32.mxu0 0.0
        %1260 = vmatmul.mubr.f32.gmra.mxu0 %v1119
        %v1261 = vpop.f32.mrf.mxu0
        %v1262 = vadd.f32 0.0, %v1261
        %v1263 = vpop.f32.mrf.mxu0
        %1264 = vdwg.mxu0
        %v1265 = vld [vmem:[#allocation2] sm:$0xff]
        %v1266 = vld [vmem:[#allocation2 + $0x8] sm:$0xff]
        %v1267 = vld [vmem:[#allocation2 + $0x10] sm:$0xff]
        %v1268 = vld [vmem:[#allocation2 + $0x18] sm:$0xff]
        %v1269 = vld [vmem:[#allocation2 + $0x20] sm:$0xff]
        %v1270 = vld [vmem:[#allocation2 + $0x28] sm:$0xff]
        %v1271 = vld [vmem:[#allocation2 + $0x30] sm:$0xff]
        %v1272 = vld [vmem:[#allocation2 + $0x38] sm:$0xff]
        %v1273 = vld [vmem:[#allocation2 + $0x40] sm:$0xff]
        %v1274 = vld [vmem:[#allocation2 + $0x48] sm:$0xff]
        %v1275 = vld [vmem:[#allocation2 + $0x50] sm:$0xff]
        %v1276 = vld [vmem:[#allocation2 + $0x58] sm:$0xff]
        %v1277 = vld [vmem:[#allocation2 + $0x60] sm:$0xff]
        %v1278 = vld [vmem:[#allocation2 + $0x68] sm:$0xff]
        %v1279 = vld [vmem:[#allocation2 + $0x70] sm:$0xff]
        %v1280 = vld [vmem:[#allocation2 + $0x78] sm:$0xff]
        %v1281 = vld [vmem:[#allocation2 + $0x80] sm:$0xff]
        %v1282 = vld [vmem:[#allocation2 + $0x88] sm:$0xff]
        %v1283 = vld [vmem:[#allocation2 + $0x90] sm:$0xff]
        %v1284 = vld [vmem:[#allocation2 + $0x98] sm:$0xff]
        %v1285 = vld [vmem:[#allocation2 + $0xa0] sm:$0xff]
        %v1286 = vld [vmem:[#allocation2 + $0xa8] sm:$0xff]
        %v1287 = vld [vmem:[#allocation2 + $0xb0] sm:$0xff]
        %v1288 = vld [vmem:[#allocation2 + $0xb8] sm:$0xff]
        %v1289 = vld [vmem:[#allocation2 + $0xc0] sm:$0xff]
        %v1290 = vld [vmem:[#allocation2 + $0xc8] sm:$0xff]
        %v1291 = vld [vmem:[#allocation2 + $0xd0] sm:$0xff]
        %v1292 = vld [vmem:[#allocation2 + $0xd8] sm:$0xff]
        %v1293 = vld [vmem:[#allocation2 + $0xe0] sm:$0xff]
        %v1294 = vld [vmem:[#allocation2 + $0xe8] sm:$0xff]
        %v1295 = vld [vmem:[#allocation2 + $0xf0] sm:$0xff]
        %v1296 = vld [vmem:[#allocation2 + $0xf8] sm:$0xff]
        %v1297 = vld [vmem:[%s296] sm:$0xff]
        %v1298 = vld [vmem:[%s296 + $0x8] sm:$0xff]
        %v1299 = vld [vmem:[%s296 + $0x10] sm:$0xff]
        %v1300 = vld [vmem:[%s296 + $0x18] sm:$0xff]
        %v1301 = vld [vmem:[%s296 + $0x20] sm:$0xff]
        %v1302 = vld [vmem:[%s296 + $0x28] sm:$0xff]
        %v1303 = vld [vmem:[%s296 + $0x30] sm:$0xff]
        %v1304 = vld [vmem:[%s296 + $0x38] sm:$0xff]
        %v1305 = vld [vmem:[%s296 + $0x40] sm:$0xff]
        %v1306 = vld [vmem:[%s296 + $0x48] sm:$0xff]
        %v1307 = vld [vmem:[%s296 + $0x50] sm:$0xff]
        %v1308 = vld [vmem:[%s296 + $0x58] sm:$0xff]
        %v1309 = vld [vmem:[%s296 + $0x60] sm:$0xff]
        %v1310 = vld [vmem:[%s296 + $0x68] sm:$0xff]
        %v1311 = vld [vmem:[%s296 + $0x70] sm:$0xff]
        %v1312 = vld [vmem:[%s296 + $0x78] sm:$0xff]
        %v1313 = vld [vmem:[%s296 + $0x80] sm:$0xff]
        %v1314 = vld [vmem:[%s296 + $0x88] sm:$0xff]
        %v1315 = vld [vmem:[%s296 + $0x90] sm:$0xff]
        %v1316 = vld [vmem:[%s296 + $0x98] sm:$0xff]
        %v1317 = vld [vmem:[%s296 + $0xa0] sm:$0xff]
        %v1318 = vld [vmem:[%s296 + $0xa8] sm:$0xff]
        %v1319 = vld [vmem:[%s296 + $0xb0] sm:$0xff]
        %v1320 = vld [vmem:[%s296 + $0xb8] sm:$0xff]
        %v1321 = vld [vmem:[%s296 + $0xc0] sm:$0xff]
        %v1322 = vld [vmem:[%s296 + $0xc8] sm:$0xff]
        %v1323 = vld [vmem:[%s296 + $0xd0] sm:$0xff]
        %v1324 = vld [vmem:[%s296 + $0xd8] sm:$0xff]
        %v1325 = vld [vmem:[%s296 + $0xe0] sm:$0xff]
        %v1326 = vld [vmem:[%s296 + $0xe8] sm:$0xff]
        %v1327 = vld [vmem:[%s296 + $0xf0] sm:$0xff]
        %v1328 = vld [vmem:[%s296 + $0xf8] sm:$0xff]
        %1329 = vmatprep.subr.mxu0 %v1328
        %1330 = vmatpush1.msra.mxu0 %v1327
        %1331 = vmatprep.subr.mxu0 %v1326
        %1332 = vmatpush1.msra.mxu0 %v1325
        %1333 = vmatprep.subr.mxu0 %v1324
        %1334 = vmatpush1.msra.mxu0 %v1323
        %1335 = vmatprep.subr.mxu0 %v1322
        %1336 = vmatpush1.msra.mxu0 %v1321
        %1337 = vmatprep.subr.mxu0 %v1320
        %1338 = vmatpush1.msra.mxu0 %v1319
        %1339 = vmatprep.subr.mxu0 %v1318
        %1340 = vmatpush1.msra.mxu0 %v1317
        %1341 = vmatprep.subr.mxu0 %v1316
        %1342 = vmatpush1.msra.mxu0 %v1315
        %1343 = vmatprep.subr.mxu0 %v1314
        %1344 = vmatpush1.msra.mxu0 %v1313
        %1345 = vmatprep.subr.mxu0 %v1312
        %1346 = vmatpush1.msra.mxu0 %v1311
        %1347 = vmatprep.subr.mxu0 %v1310
        %1348 = vmatpush1.msra.mxu0 %v1309
        %1349 = vmatprep.subr.mxu0 %v1308
        %1350 = vmatpush1.msra.mxu0 %v1307
        %1351 = vmatprep.subr.mxu0 %v1306
        %1352 = vmatpush1.msra.mxu0 %v1305
        %1353 = vmatprep.subr.mxu0 %v1304
        %1354 = vmatpush1.msra.mxu0 %v1303
        %1355 = vmatprep.subr.mxu0 %v1302
        %1356 = vmatpush1.msra.mxu0 %v1301
        %1357 = vmatprep.subr.mxu0 %v1300
        %1358 = vmatpush1.msra.mxu0 %v1299
        %1359 = vmatprep.subr.mxu0 %v1298
        %1360 = vmatpush1.msra.mxu0 %v1297
        %1361 = vmatprep.subr.mxu0 0.0
        %1362 = vmatpush2.msra.mxu0 0.0
        %1363 = vmatprep.subr.mxu0 0.0
        %1364 = vmatpush2.msra.mxu0 0.0
        %1365 = vmatprep.subr.mxu0 0.0
        %1366 = vmatpush2.msra.mxu0 0.0
        %1367 = vmatprep.subr.mxu0 0.0
        %1368 = vmatpush2.msra.mxu0 0.0
        %1369 = vmatprep.subr.mxu0 0.0
        %1370 = vmatpush2.msra.mxu0 0.0
        %1371 = vmatprep.subr.mxu0 0.0
        %1372 = vmatpush2.msra.mxu0 0.0
        %1373 = vmatprep.subr.mxu0 0.0
        %1374 = vmatpush2.msra.mxu0 0.0
        %1375 = vmatprep.subr.mxu0 0.0
        %1376 = vmatpush2.msra.mxu0 0.0
        %1377 = vmatprep.subr.mxu0 0.0
        %1378 = vmatpush2.msra.mxu0 0.0
        %1379 = vmatprep.subr.mxu0 0.0
        %1380 = vmatpush2.msra.mxu0 0.0
        %1381 = vmatprep.subr.mxu0 0.0
        %1382 = vmatpush2.msra.mxu0 0.0
        %1383 = vmatprep.subr.mxu0 0.0
        %1384 = vmatpush2.msra.mxu0 0.0
        %1385 = vmatprep.subr.mxu0 0.0
        %1386 = vmatpush2.msra.mxu0 0.0
        %1387 = vmatprep.subr.mxu0 0.0
        %1388 = vmatpush2.msra.mxu0 0.0
        %1389 = vmatprep.subr.mxu0 0.0
        %1390 = vmatpush2.msra.mxu0 0.0
        %1391 = vmatprep.subr.mxu0 0.0
        %1392 = vmatpush2.msra.mxu0 0.0
        %1393 = vmatprep.mubr.f32.mxu0 0.0
        %1394 = vmatmul.mubr.f32.gmra.mxu0 %v1187
        %v1395 = vpop.f32.mrf.mxu0
        %v1396 = vadd.f32 0.0, %v1395
        %v1397 = vpop.f32.mrf.mxu0
        %v1398 = vadd.f32 0.0, %v1397
        %1399 = vmatprep.mubr.f32.mxu0 0.0
        %1400 = vmatmul.mubr.f32.gmra.mxu0 %v1192
        %v1401 = vpop.f32.mrf.mxu0
        %v1402 = vadd.f32 0.0, %v1401
        %v1403 = vpop.f32.mrf.mxu0
        %v1404 = vadd.f32 0.0, %v1403
        %1405 = vmatprep.mubr.f32.mxu0 0.0
        %1406 = vmatmul.mubr.f32.gmra.mxu0 %v1197
        %v1407 = vpop.f32.mrf.mxu0
        %v1408 = vadd.f32 0.0, %v1407
        %v1409 = vpop.f32.mrf.mxu0
        %v1410 = vadd.f32 0.0, %v1409
        %1411 = vmatprep.mubr.f32.mxu0 0.0
        %1412 = vmatmul.mubr.f32.gmra.mxu0 %v1202
        %v1413 = vpop.f32.mrf.mxu0
        %v1414 = vadd.f32 0.0, %v1413
        %v1415 = vpop.f32.mrf.mxu0
        %v1416 = vadd.f32 0.0, %v1415
        %1417 = vmatprep.mubr.f32.mxu0 0.0
        %1418 = vmatmul.mubr.f32.gmra.mxu0 %v1207
        %v1419 = vpop.f32.mrf.mxu0
        %v1420 = vadd.f32 0.0, %v1419
        %v1421 = vpop.f32.mrf.mxu0
        %v1422 = vadd.f32 0.0, %v1421
        %1423 = vmatprep.mubr.f32.mxu0 0.0
        %1424 = vmatmul.mubr.f32.gmra.mxu0 %v1212
        %v1425 = vpop.f32.mrf.mxu0
        %v1426 = vadd.f32 0.0, %v1425
        %v1427 = vpop.f32.mrf.mxu0
        %v1428 = vadd.f32 0.0, %v1427
        %1429 = vmatprep.mubr.f32.mxu0 0.0
        %1430 = vmatmul.mubr.f32.gmra.mxu0 %v1217
        %v1431 = vpop.f32.mrf.mxu0
        %v1432 = vadd.f32 0.0, %v1431
        %v1433 = vpop.f32.mrf.mxu0
        %v1434 = vadd.f32 0.0, %v1433
        %1435 = vmatprep.mubr.f32.mxu0 0.0
        %1436 = vmatmul.mubr.f32.gmra.mxu0 %v1222
        %v1437 = vpop.f32.mrf.mxu0
        %v1438 = vadd.f32 0.0, %v1437
        %v1439 = vpop.f32.mrf.mxu0
        %v1440 = vadd.f32 0.0, %v1439
        %1441 = vmatprep.mubr.f32.mxu0 0.0
        %1442 = vmatmul.mubr.f32.gmra.mxu0 %v1227
        %v1443 = vpop.f32.mrf.mxu0
        %v1444 = vadd.f32 0.0, %v1443
        %v1445 = vpop.f32.mrf.mxu0
        %v1446 = vadd.f32 0.0, %v1445
        %1447 = vmatprep.mubr.f32.mxu0 0.0
        %1448 = vmatmul.mubr.f32.gmra.mxu0 %v1232
        %v1449 = vpop.f32.mrf.mxu0
        %v1450 = vadd.f32 0.0, %v1449
        %v1451 = vpop.f32.mrf.mxu0
        %v1452 = vadd.f32 0.0, %v1451
        %1453 = vmatprep.mubr.f32.mxu0 0.0
        %1454 = vmatmul.mubr.f32.gmra.mxu0 %v1237
        %v1455 = vpop.f32.mrf.mxu0
        %v1456 = vadd.f32 0.0, %v1455
        %v1457 = vpop.f32.mrf.mxu0
        %v1458 = vadd.f32 0.0, %v1457
        %1459 = vmatprep.mubr.f32.mxu0 0.0
        %1460 = vmatmul.mubr.f32.gmra.mxu0 %v1242
        %v1461 = vpop.f32.mrf.mxu0
        %v1462 = vadd.f32 0.0, %v1461
        %v1463 = vpop.f32.mrf.mxu0
        %v1464 = vadd.f32 0.0, %v1463
        %1465 = vmatprep.mubr.f32.mxu0 0.0
        %1466 = vmatmul.mubr.f32.gmra.mxu0 %v1247
        %v1467 = vpop.f32.mrf.mxu0
        %v1468 = vadd.f32 0.0, %v1467
        %v1469 = vpop.f32.mrf.mxu0
        %v1470 = vadd.f32 0.0, %v1469
        %1471 = vmatprep.mubr.f32.mxu0 0.0
        %1472 = vmatmul.mubr.f32.gmra.mxu0 %v1252
        %v1473 = vpop.f32.mrf.mxu0
        %v1474 = vadd.f32 0.0, %v1473
        %v1475 = vpop.f32.mrf.mxu0
        %v1476 = vadd.f32 0.0, %v1475
        %1477 = vmatprep.mubr.f32.mxu0 0.0
        %1478 = vmatmul.mubr.f32.gmra.mxu0 %v1257
        %v1479 = vpop.f32.mrf.mxu0
        %v1480 = vadd.f32 0.0, %v1479
        %v1481 = vpop.f32.mrf.mxu0
        %v1482 = vadd.f32 0.0, %v1481
        %1483 = vmatprep.mubr.f32.mxu0 0.0
        %1484 = vmatmul.mubr.f32.gmra.mxu0 %v1262
        %v1485 = vpop.f32.mrf.mxu0
        %v1486 = vadd.f32 0.0, %v1485
        %v1487 = vpop.f32.mrf.mxu0
        %v1488 = vadd.f32 0.0, %v1487
        %1489 = vdwg.mxu0
        %v1490 = vadd.f32 %v1265, %v1396
        %v1491 = vadd.f32 %v1266, %v1398
        %v1492 = vadd.f32 %v1267, %v1402
        %v1493 = vadd.f32 %v1268, %v1404
        %v1494 = vadd.f32 %v1269, %v1408
        %v1495 = vadd.f32 %v1270, %v1410
        %v1496 = vadd.f32 %v1271, %v1414
        %v1497 = vadd.f32 %v1272, %v1416
        %v1498 = vadd.f32 %v1273, %v1420
        %v1499 = vadd.f32 %v1274, %v1422
        %v1500 = vadd.f32 %v1275, %v1426
        %v1501 = vadd.f32 %v1276, %v1428
        %v1502 = vadd.f32 %v1277, %v1432
        %v1503 = vadd.f32 %v1278, %v1434
        %v1504 = vadd.f32 %v1279, %v1438
        %v1505 = vadd.f32 %v1280, %v1440
        %v1506 = vadd.f32 %v1281, %v1444
        %v1507 = vadd.f32 %v1282, %v1446
        %v1508 = vadd.f32 %v1283, %v1450
        %v1509 = vadd.f32 %v1284, %v1452
        %v1510 = vadd.f32 %v1285, %v1456
        %v1511 = vadd.f32 %v1286, %v1458
        %v1512 = vadd.f32 %v1287, %v1462
        %v1513 = vadd.f32 %v1288, %v1464
        %v1514 = vadd.f32 %v1289, %v1468
        %v1515 = vadd.f32 %v1290, %v1470
        %v1516 = vadd.f32 %v1291, %v1474
        %v1517 = vadd.f32 %v1292, %v1476
        %v1518 = vadd.f32 %v1293, %v1480
        %v1519 = vadd.f32 %v1294, %v1482
        %v1520 = vadd.f32 %v1295, %v1486
        %v1521 = vadd.f32 %v1296, %v1488
        %1522 = vst [vmem:[#allocation2] sm:$0xff] %v1490
        %1523 = vst [vmem:[#allocation2 + $0x8] sm:$0xff] %v1491
        %1524 = vst [vmem:[#allocation2 + $0x10] sm:$0xff] %v1492
        %1525 = vst [vmem:[#allocation2 + $0x18] sm:$0xff] %v1493
        %1526 = vst [vmem:[#allocation2 + $0x20] sm:$0xff] %v1494
        %1527 = vst [vmem:[#allocation2 + $0x28] sm:$0xff] %v1495
        %1528 = vst [vmem:[#allocation2 + $0x30] sm:$0xff] %v1496
        %1529 = vst [vmem:[#allocation2 + $0x38] sm:$0xff] %v1497
        %1530 = vst [vmem:[#allocation2 + $0x40] sm:$0xff] %v1498
        %1531 = vst [vmem:[#allocation2 + $0x48] sm:$0xff] %v1499
        %1532 = vst [vmem:[#allocation2 + $0x50] sm:$0xff] %v1500
        %1533 = vst [vmem:[#allocation2 + $0x58] sm:$0xff] %v1501
        %1534 = vst [vmem:[#allocation2 + $0x60] sm:$0xff] %v1502
        %1535 = vst [vmem:[#allocation2 + $0x68] sm:$0xff] %v1503
        %1536 = vst [vmem:[#allocation2 + $0x70] sm:$0xff] %v1504
        %1537 = vst [vmem:[#allocation2 + $0x78] sm:$0xff] %v1505
        %1538 = vst [vmem:[#allocation2 + $0x80] sm:$0xff] %v1506
        %1539 = vst [vmem:[#allocation2 + $0x88] sm:$0xff] %v1507
        %1540 = vst [vmem:[#allocation2 + $0x90] sm:$0xff] %v1508
        %1541 = vst [vmem:[#allocation2 + $0x98] sm:$0xff] %v1509
        %1542 = vst [vmem:[#allocation2 + $0xa0] sm:$0xff] %v1510
        %1543 = vst [vmem:[#allocation2 + $0xa8] sm:$0xff] %v1511
        %1544 = vst [vmem:[#allocation2 + $0xb0] sm:$0xff] %v1512
        %1545 = vst [vmem:[#allocation2 + $0xb8] sm:$0xff] %v1513
        %1546 = vst [vmem:[#allocation2 + $0xc0] sm:$0xff] %v1514
        %1547 = vst [vmem:[#allocation2 + $0xc8] sm:$0xff] %v1515
        %1548 = vst [vmem:[#allocation2 + $0xd0] sm:$0xff] %v1516
        %1549 = vst [vmem:[#allocation2 + $0xd8] sm:$0xff] %v1517
        %1550 = vst [vmem:[#allocation2 + $0xe0] sm:$0xff] %v1518
        %1551 = vst [vmem:[#allocation2 + $0xe8] sm:$0xff] %v1519
        %1552 = vst [vmem:[#allocation2 + $0xf0] sm:$0xff] %v1520
        %1553 = vst [vmem:[#allocation2 + $0xf8] sm:$0xff] %v1521
        %p1554 = scmp.eq.s32.totalorder %s32, 3
        // Predicated region
        $region57: #{tpu_custom_call.1} parent=35 // pred_check
          %p1555 = pneg %p1554
        $region58: #{tpu_custom_call.1} parent=35 // pred_check_branch
          %1557 = sbr.rel (%p1555) target = $region60
        $region59: #{tpu_custom_call.1} parent=35 // pred_region
          %v1558 = vld [vmem:[#allocation2] sm:$0xff]
          %v1559 = vld [vmem:[#allocation2 + $0x8] sm:$0xff]
          %v1560 = vld [vmem:[#allocation2 + $0x10] sm:$0xff]
          %v1561 = vld [vmem:[#allocation2 + $0x18] sm:$0xff]
          %v1562 = vld [vmem:[#allocation2 + $0x20] sm:$0xff]
          %v1563 = vld [vmem:[#allocation2 + $0x28] sm:$0xff]
          %v1564 = vld [vmem:[#allocation2 + $0x30] sm:$0xff]
          %v1565 = vld [vmem:[#allocation2 + $0x38] sm:$0xff]
          %v1566 = vld [vmem:[#allocation2 + $0x40] sm:$0xff]
          %v1567 = vld [vmem:[#allocation2 + $0x48] sm:$0xff]
          %v1568 = vld [vmem:[#allocation2 + $0x50] sm:$0xff]
          %v1569 = vld [vmem:[#allocation2 + $0x58] sm:$0xff]
          %v1570 = vld [vmem:[#allocation2 + $0x60] sm:$0xff]
          %v1571 = vld [vmem:[#allocation2 + $0x68] sm:$0xff]
          %v1572 = vld [vmem:[#allocation2 + $0x70] sm:$0xff]
          %v1573 = vld [vmem:[#allocation2 + $0x78] sm:$0xff]
          %v1574 = vld [vmem:[#allocation2 + $0x80] sm:$0xff]
          %v1575 = vld [vmem:[#allocation2 + $0x88] sm:$0xff]
          %v1576 = vld [vmem:[#allocation2 + $0x90] sm:$0xff]
          %v1577 = vld [vmem:[#allocation2 + $0x98] sm:$0xff]
          %v1578 = vld [vmem:[#allocation2 + $0xa0] sm:$0xff]
          %v1579 = vld [vmem:[#allocation2 + $0xa8] sm:$0xff]
          %v1580 = vld [vmem:[#allocation2 + $0xb0] sm:$0xff]
          %v1581 = vld [vmem:[#allocation2 + $0xb8] sm:$0xff]
          %v1582 = vld [vmem:[#allocation2 + $0xc0] sm:$0xff]
          %v1583 = vld [vmem:[#allocation2 + $0xc8] sm:$0xff]
          %v1584 = vld [vmem:[#allocation2 + $0xd0] sm:$0xff]
          %v1585 = vld [vmem:[#allocation2 + $0xd8] sm:$0xff]
          %v1586 = vld [vmem:[#allocation2 + $0xe0] sm:$0xff]
          %v1587 = vld [vmem:[#allocation2 + $0xe8] sm:$0xff]
          %v1588 = vld [vmem:[#allocation2 + $0xf0] sm:$0xff]
          %v1589 = vld [vmem:[#allocation2 + $0xf8] sm:$0xff]
          %1590 = vst [vmem:[%s344] sm:$0xff] %v1558
          %1591 = vst [vmem:[%s344 + $0x8] sm:$0xff] %v1559
          %1592 = vst [vmem:[%s344 + $0x10] sm:$0xff] %v1560
          %1593 = vst [vmem:[%s344 + $0x18] sm:$0xff] %v1561
          %1594 = vst [vmem:[%s344 + $0x20] sm:$0xff] %v1562
          %1595 = vst [vmem:[%s344 + $0x28] sm:$0xff] %v1563
          %1596 = vst [vmem:[%s344 + $0x30] sm:$0xff] %v1564
          %1597 = vst [vmem:[%s344 + $0x38] sm:$0xff] %v1565
          %1598 = vst [vmem:[%s344 + $0x40] sm:$0xff] %v1566
          %1599 = vst [vmem:[%s344 + $0x48] sm:$0xff] %v1567
          %1600 = vst [vmem:[%s344 + $0x50] sm:$0xff] %v1568
          %1601 = vst [vmem:[%s344 + $0x58] sm:$0xff] %v1569
          %1602 = vst [vmem:[%s344 + $0x60] sm:$0xff] %v1570
          %1603 = vst [vmem:[%s344 + $0x68] sm:$0xff] %v1571
          %1604 = vst [vmem:[%s344 + $0x70] sm:$0xff] %v1572
          %1605 = vst [vmem:[%s344 + $0x78] sm:$0xff] %v1573
          %1606 = vst [vmem:[%s344 + $0x80] sm:$0xff] %v1574
          %1607 = vst [vmem:[%s344 + $0x88] sm:$0xff] %v1575
          %1608 = vst [vmem:[%s344 + $0x90] sm:$0xff] %v1576
          %1609 = vst [vmem:[%s344 + $0x98] sm:$0xff] %v1577
          %1610 = vst [vmem:[%s344 + $0xa0] sm:$0xff] %v1578
          %1611 = vst [vmem:[%s344 + $0xa8] sm:$0xff] %v1579
          %1612 = vst [vmem:[%s344 + $0xb0] sm:$0xff] %v1580
          %1613 = vst [vmem:[%s344 + $0xb8] sm:$0xff] %v1581
          %1614 = vst [vmem:[%s344 + $0xc0] sm:$0xff] %v1582
          %1615 = vst [vmem:[%s344 + $0xc8] sm:$0xff] %v1583
          %1616 = vst [vmem:[%s344 + $0xd0] sm:$0xff] %v1584
          %1617 = vst [vmem:[%s344 + $0xd8] sm:$0xff] %v1585
          %1618 = vst [vmem:[%s344 + $0xe0] sm:$0xff] %v1586
          %1619 = vst [vmem:[%s344 + $0xe8] sm:$0xff] %v1587
          %1620 = vst [vmem:[%s344 + $0xf0] sm:$0xff] %v1588
          %1621 = vst [vmem:[%s344 + $0xf8] sm:$0xff] %v1589
        $region60: #{tpu_custom_call.1} parent=35 // pred_fallthru
          _
        %s1622 = sand.u32 %s151, 1
        %s1623 = scalar_lea.sflag [#allocation5], %s1622
        %s1624 = sand.u32 %s151, 1
        %s1625 = smul.addr %s1624, 256
        %s1626 = scalar_lea.vmem [#allocation11], %s1625
        // Predicated region
        $region61: #{tpu_custom_call.1} parent=35 // pred_check
          %p1627 = pneg %p161
        $region62: #{tpu_custom_call.1} parent=35 // pred_check_branch
          %1629 = sbr.rel (%p1627) target = $region64
        $region63: #{tpu_custom_call.1} parent=35 // pred_region
          %s1631 = ssub.s32 4096, 4096
          %1632 = vsyncadd %s1623, %s1631
          %s1633 = smul.addr %s31, 32
          %s1634 = smul.addr %s1633, 128
          %s1635 = scalar_lea.hbm %s4, %s1634
          %s1636 = sshll.u32 %s1626, 4
          %s1637 = int_to_ptr.vmem [resolvable:$true] %s1636
          %1642 = dma.vmem_to_hbm [thread:$0]  %s1637, 4096, %s1635, %s1623, 256, 256, 16
        $region64: #{tpu_custom_call.1} parent=35 // pred_fallthru
          _
      $region36: #{tpu_custom_call.1} parent=5 // pred_fallthru
        _
      %p1643 = scmp.le.s32.totalorder 2, %s22
      // Predicated region
      $region65: #{tpu_custom_call.1} parent=5 // pred_check
        %p1644 = pneg %p1643
      $region66: #{tpu_custom_call.1} parent=5 // pred_check_branch
        %1646 = sbr.rel (%p1644) target = $region68
      $region67: #{tpu_custom_call.1} parent=5 // pred_region
        %s1647 = ssub.s32 %s22, 2
        // Predicated region
        $region69: #{tpu_custom_call.1} parent=67 // pred_check
          %p1648 = pneg %p167
        $region70: #{tpu_custom_call.1} parent=67 // pred_check_branch
          %1650 = sbr.rel (%p1648) target = $region72
        $region71: #{tpu_custom_call.1} parent=67 // pred_region
          %s1651 = sand.u32 %s152, 1
          %s1652 = scalar_lea.sflag [#allocation5], %s1651
          %s1653 = sand.u32 %s152, 1
          %s1654 = smul.addr %s1653, 256
          %s1655 = scalar_lea.vmem [#allocation11], %s1654
          %1656 = dma.done %s1652, 4096
        $region72: #{tpu_custom_call.1} parent=67 // pred_fallthru
          _
      $region68: #{tpu_custom_call.1} parent=5 // pred_fallthru
        _
    $region6: #{tpu_custom_call.1} parent=1 // loop_footer
      %s26 = sadd.s32 1, %s22
    $region7: #{tpu_custom_call.1} parent=1 // loop_footer_branch
      %21 = sbr.rel target = $region3
    $region8: #{tpu_custom_call.1} parent=1 // loop_exit
      _
    %1657 = vsyncpa [#allocation4], 1
    %s1658 = scalar_lea.sflag [#allocation4], 1
    %1659 = vsyncpa %s1658, 1
    %1660 = vsyncpa [#allocation7], 1
    %s1661 = scalar_lea.sflag [#allocation7], 1
    %1662 = vsyncpa %s1661, 1
    %1663 = vsyncpa [#allocation10], 1
    %s1664 = scalar_lea.sflag [#allocation10], 1
    %1665 = vsyncpa %s1664, 1
    %1666 = vsyncpa [#allocation5], 1
    %s1667 = scalar_lea.sflag [#allocation5], 1
    %1668 = vsyncpa %s1667, 1

</llo_original>
